<compile_context>
chip_gen: v6e
topology: v6e:2x2x1
jax: 0.10.0
libtpu: 0.0.40
codegen_flags: <defaults>
</compile_context>

<pallas_src>
import functools

import jax
import jax.numpy as jnp
from jax.experimental import pallas as pl
from jax.experimental.pallas import tpu as pltpu


def _rbfdqn_forward_kernel(
    s_ref, a_ref,
    vw1_ref, vb1_ref, vw2_ref, vb2_ref, vw3_ref, vb3_ref, vw4_ref, vb4_ref,
    lw1_ref, lb1_ref, lw2_ref, lb2_ref,
    q_ref,
    *, beta, max_a, N, A,
):
    f32 = jnp.float32
    bf16 = jnp.bfloat16

    s = s_ref[...]                      # [TB, S] bf16 (cast in wrapper)
    a = a_ref[...].astype(f32)          # [TB, A] f32

    def dense(x_bf16, w_ref, b_ref):
        # bf16 x bf16 MXU matmul with f32 accumulation; bias add in f32.
        return jnp.dot(x_bf16, w_ref[...], preferred_element_type=f32) + b_ref[...]

    # ---- value_module: (Linear + ReLU) x 3 + Linear -> centroid values [TB, N]
    h = jnp.maximum(dense(s, vw1_ref, vb1_ref), 0.0)
    h = jnp.maximum(dense(h.astype(bf16), vw2_ref, vb2_ref), 0.0)
    h = jnp.maximum(dense(h.astype(bf16), vw3_ref, vb3_ref), 0.0)
    values = dense(h.astype(bf16), vw4_ref, vb4_ref)                 # [TB, N] f32

    # ---- location_module (num_layers_action_side == 1):
    #      Linear + Dropout(identity at eval) + ReLU + Linear + Sigmoid, * max_a
    # lw2/lb2 columns were permuted host-side to k-major layout: col = k*N + n.
    g = jnp.maximum(dense(s, lw1_ref, lb1_ref), 0.0)
    loc_flat = dense(g.astype(bf16), lw2_ref, lb2_ref)               # [TB, N*A] f32
    loc = max_a * jax.nn.sigmoid(loc_flat)                           # centroid locations

    # ---- rbf_function_on_action: per-centroid squared distance to `a`
    # dist_sq[b, n] = sum_k (loc[b, k*N + n] - a[b, k])^2
    dist_sq = None
    for k in range(A):                                               # static unroll, A small
        d = loc[:, k * N:(k + 1) * N] - a[:, k:k + 1]                # [TB, N]
        d2 = d * d
        dist_sq = d2 if dist_sq is None else dist_sq + d2

    dist = jnp.sqrt(dist_sq + 1e-7)
    logits = dist * (-beta)
    logits = logits - jnp.max(logits, axis=1, keepdims=True)         # softmax over centroids
    e = jnp.exp(logits)

    # ---- Q(s, a): fused softmax-normalisation + weighted sum of centroid values
    num = jnp.sum(e * values, axis=1, keepdims=True)                 # [TB, 1]
    den = jnp.sum(e, axis=1, keepdims=True)                          # [TB, 1]
    q_ref[...] = num * pl.reciprocal(den, approx=True)


def make_params(key, state_size, layer_size, layer_size_action_side, N, action_size):
    """Deterministic parameter init mirroring the PyTorch __init__ (weights stored [in, out])."""
    ks = jax.random.split(key, 12)

    def torch_linear(kw, kb, fan_in, fan_out):
        bound = 1.0 / float(jnp.sqrt(jnp.float32(fan_in)))
        W = jax.random.uniform(kw, (fan_in, fan_out), jnp.float32, -bound, bound)
        b = jax.random.uniform(kb, (1, fan_out), jnp.float32, -bound, bound)
        return W, b

    # value_module: default torch.nn.Linear init
    vw1, vb1 = torch_linear(ks[0], ks[1], state_size, layer_size)
    vw2, vb2 = torch_linear(ks[2], ks[3], layer_size, layer_size)
    vw3, vb3 = torch_linear(ks[4], ks[5], layer_size, layer_size)
    vw4, vb4 = torch_linear(ks[6], ks[7], layer_size, N)

    # location_module: xavier_uniform_ + zeros_ on layer 0, uniform(-0.1,0.1)/(-1,1) on layer 3
    xav = float(jnp.sqrt(6.0 / (state_size + layer_size_action_side)))
    lw1 = jax.random.uniform(ks[8], (state_size, layer_size_action_side), jnp.float32, -xav, xav)
    lb1 = jnp.zeros((1, layer_size_action_side), jnp.float32)
    lw2 = jax.random.uniform(ks[9], (layer_size_action_side, N * action_size), jnp.float32, -0.1, 0.1)
    lb2 = jax.random.uniform(ks[10], (1, N * action_size), jnp.float32, -1.0, 1.0)

    return (vw1, vb1, vw2, vb2, vw3, vb3, vw4, vb4, lw1, lb1, lw2, lb2)


def prepare_kernel_params(params, N, A):
    """Permute the location head to k-major columns and cast weights to bf16."""
    (vw1, vb1, vw2, vb2, vw3, vb3, vw4, vb4, lw1, lb1, lw2, lb2) = params
    # new column j = k*N + n  takes old column n*A + k
    perm = jnp.arange(N * A).reshape(N, A).T.reshape(-1)
    lw2 = lw2[:, perm]
    lb2 = lb2[:, perm]
    bf = jnp.bfloat16
    return (vw1.astype(bf), vb1, vw2.astype(bf), vb2, vw3.astype(bf), vb3,
            vw4.astype(bf), vb4, lw1.astype(bf), lb1, lw2.astype(bf), lb2)


@functools.partial(jax.jit, static_argnames=("beta", "max_a", "N", "A", "block_b"))
def rbfdqn_forward(s, a, kparams, *, beta, max_a, N, A, block_b=128):
    B, S = s.shape
    A_dim = a.shape[1]
    n_tiles = pl.cdiv(B, block_b)
    Bp = n_tiles * block_b
    if Bp != B:                                   # pad batch to a tile multiple
        s = jnp.pad(s, ((0, Bp - B), (0, 0)))
        a = jnp.pad(a, ((0, Bp - B), (0, 0)))
    s = s.astype(jnp.bfloat16)
    a = a.astype(jnp.float32)

    kernel = functools.partial(_rbfdqn_forward_kernel, beta=beta, max_a=max_a, N=N, A=A)

    batch_specs = [
        pl.BlockSpec((block_b, S), lambda i: (i, 0)),        # s tile
        pl.BlockSpec((block_b, A_dim), lambda i: (i, 0)),    # a tile
    ]
    # Weights/biases: full arrays, constant block index -> DMA'd once, resident.
    weight_specs = [pl.BlockSpec(p.shape, lambda i: (0, 0)) for p in kparams]

    q = pl.pallas_call(
        kernel,
        out_shape=jax.ShapeDtypeStruct((Bp, 1), jnp.float32),
        grid=(n_tiles,),
        in_specs=batch_specs + weight_specs,
        out_specs=pl.BlockSpec((block_b, 1), lambda i: (i, 0)),
        compiler_params=pltpu.CompilerParams(dimension_semantics=("parallel",)),
    )(s, a, *kparams)
    return q[:B]


def reference_forward(s, a, params, beta, max_a, N, A, bf16_matmuls=False):
    """Pure-JAX reference mirroring Net.forward / rbf_function_on_action semantics.

    With bf16_matmuls=True, matmul operands are rounded to bf16 (f32 accumulation)
    to mirror the kernel's precision choices exactly.
    """
    (vw1, vb1, vw2, vb2, vw3, vb3, vw4, vb4, lw1, lb1, lw2, lb2) = params

    def dense(x, w, b):
        if bf16_matmuls:
            x = x.astype(jnp.bfloat16)
            w = w.astype(jnp.bfloat16)
        return jnp.dot(x, w, preferred_element_type=jnp.float32) + b

    h = jax.nn.relu(dense(s, vw1, vb1))
    h = jax.nn.relu(dense(h, vw2, vb2))
    h = jax.nn.relu(dense(h, vw3, vb3))
    values = dense(h, vw4, vb4)                                  # [B, N]
    g = jax.nn.relu(dense(s, lw1, lb1))
    loc = max_a * jax.nn.sigmoid(dense(g, lw2, lb2))             # [B, N*A]
    B = s.shape[0]
    loc3 = loc.reshape(B, N, A)
    diff = loc3 - a[:, None, :]
    dist = jnp.sqrt(jnp.sum(diff * diff, axis=2) + 1e-7)
    w = jax.nn.softmax(-beta * dist, axis=1)
    return jnp.sum(w * values, axis=1, keepdims=True)


if __name__ == "__main__":
    # Small deterministic shapes consistent with Net.forward(s, a); the batch is
    # sized so the batch grid has two tiles and actually exercises the pipeline.
    B = 128          # batch
    S = 16           # state_size
    L = 64           # params['layer_size']
    LS = 64          # params['layer_size_action_side']
    N = 32           # params['num_points']
    A = 4            # action_size
    BETA = 1.0       # params['temperature']
    MAX_A = 2.0      # env.action_space.high[0]
    TB = 64          # batch tile (sublane-aligned, 2 grid steps)

    key = jax.random.PRNGKey(0)
    k_s, k_a, k_p = jax.random.split(key, 3)

    s = jax.random.normal(k_s, (B, S), jnp.float32)
    a = jax.random.uniform(k_a, (B, A), jnp.float32, -MAX_A, MAX_A)

    params = make_params(k_p, S, L, LS, N, A)
    kparams = prepare_kernel_params(params, N, A)

    q = rbfdqn_forward(s, a, kparams, beta=BETA, max_a=MAX_A, N=N, A=A, block_b=TB)
    q = jax.block_until_ready(q)
    assert q.shape == (B, 1), q.shape

    # Tight check vs a reference that mirrors the kernel's bf16-matmul precision.
    q_mirror = reference_forward(s, a, params, BETA, MAX_A, N, A, bf16_matmuls=True)
    assert jnp.allclose(q, q_mirror, atol=1e-2, rtol=1e-2), (
        float(jnp.max(jnp.abs(q - q_mirror))))

    # Looser check vs the full-f32 PyTorch-semantics reference (bf16 drift).
    q_f32 = reference_forward(s, a, params, BETA, MAX_A, N, A, bf16_matmuls=False)
    assert jnp.allclose(q, q_f32, atol=5e-2, rtol=5e-2), (
        float(jnp.max(jnp.abs(q - q_f32))))

    print("KERNEL_OK")
</pallas_src>

<mosaic_0001>
module attributes {stable_mosaic.version = 11 : i64} {
  func.func @_rbfdqn_forward_kernel(%arg0: i32, %arg1: memref<64x16xbf16, #tpu.memory_space<vmem>>, %arg2: memref<64x4xf32, #tpu.memory_space<vmem>>, %arg3: memref<16x64xbf16, #tpu.memory_space<vmem>>, %arg4: memref<1x64xf32, #tpu.memory_space<vmem>>, %arg5: memref<64x64xbf16, #tpu.memory_space<vmem>>, %arg6: memref<1x64xf32, #tpu.memory_space<vmem>>, %arg7: memref<64x64xbf16, #tpu.memory_space<vmem>>, %arg8: memref<1x64xf32, #tpu.memory_space<vmem>>, %arg9: memref<64x32xbf16, #tpu.memory_space<vmem>>, %arg10: memref<1x32xf32, #tpu.memory_space<vmem>>, %arg11: memref<16x64xbf16, #tpu.memory_space<vmem>>, %arg12: memref<1x64xf32, #tpu.memory_space<vmem>>, %arg13: memref<64x128xbf16, #tpu.memory_space<vmem>>, %arg14: memref<1x128xf32, #tpu.memory_space<vmem>>, %arg15: memref<64x1xf32, #tpu.memory_space<vmem>>) attributes {dimension_semantics = [#tpu.dimension_semantics<parallel>], iteration_bounds = array<i64: 2>, scalar_prefetch = 0 : i64, scratch_operands = 0 : i64, tpu.core_type = #tpu.core_type<tc>, window_params = [{transform_indices = @transform_0, window_bounds = array<i64: 64, 16>}, {transform_indices = @transform_1, window_bounds = array<i64: 64, 4>}, {pipeline_mode = #tpu.pipeline_mode<synchronous>, transform_indices = @transform_2, window_bounds = array<i64: 16, 64>}, {pipeline_mode = #tpu.pipeline_mode<synchronous>, transform_indices = @transform_3, window_bounds = array<i64: 1, 64>}, {pipeline_mode = #tpu.pipeline_mode<synchronous>, transform_indices = @transform_4, window_bounds = array<i64: 64, 64>}, {pipeline_mode = #tpu.pipeline_mode<synchronous>, transform_indices = @transform_5, window_bounds = array<i64: 1, 64>}, {pipeline_mode = #tpu.pipeline_mode<synchronous>, transform_indices = @transform_6, window_bounds = array<i64: 64, 64>}, {pipeline_mode = #tpu.pipeline_mode<synchronous>, transform_indices = @transform_7, window_bounds = array<i64: 1, 64>}, {pipeline_mode = #tpu.pipeline_mode<synchronous>, transform_indices = @transform_8, window_bounds = array<i64: 64, 32>}, {pipeline_mode = #tpu.pipeline_mode<synchronous>, transform_indices = @transform_9, window_bounds = array<i64: 1, 32>}, {pipeline_mode = #tpu.pipeline_mode<synchronous>, transform_indices = @transform_10, window_bounds = array<i64: 16, 64>}, {pipeline_mode = #tpu.pipeline_mode<synchronous>, transform_indices = @transform_11, window_bounds = array<i64: 1, 64>}, {pipeline_mode = #tpu.pipeline_mode<synchronous>, transform_indices = @transform_12, window_bounds = array<i64: 64, 128>}, {pipeline_mode = #tpu.pipeline_mode<synchronous>, transform_indices = @transform_13, window_bounds = array<i64: 1, 128>}, {transform_indices = @transform_14, window_bounds = array<i64: 64, 1>}]} {
    %c0 = arith.constant 0 : index
    %c0_0 = arith.constant 0 : index
    %0 = vector.load %arg1[%c0, %c0_0] : memref<64x16xbf16, #tpu.memory_space<vmem>>, vector<64x16xbf16>
    %c0_1 = arith.constant 0 : index
    %c0_2 = arith.constant 0 : index
    %1 = vector.load %arg2[%c0_1, %c0_2] : memref<64x4xf32, #tpu.memory_space<vmem>>, vector<64x4xf32>
    %c0_3 = arith.constant 0 : index
    %c0_4 = arith.constant 0 : index
    %2 = vector.load %arg3[%c0_3, %c0_4] : memref<16x64xbf16, #tpu.memory_space<vmem>>, vector<16x64xbf16>
    %cst = arith.constant dense<0.000000e+00> : vector<64x64xf32>
    %3 = tpu.matmul %0, %2, %cst {dimension_numbers = #tpu.dot_dimension_numbers<[1], [0], [0], [1], [0, 0, 1, 1], [], []>} : vector<64x16xbf16>, vector<16x64xbf16>, vector<64x64xf32> -> vector<64x64xf32>
    %c0_5 = arith.constant 0 : index
    %c0_6 = arith.constant 0 : index
    %4 = vector.load %arg4[%c0_5, %c0_6] : memref<1x64xf32, #tpu.memory_space<vmem>>, vector<1x64xf32>
    %5 = vector.broadcast %4 : vector<1x64xf32> to vector<64x64xf32>
    %6 = arith.addf %3, %5 : vector<64x64xf32>
    %cst_7 = arith.constant 0.000000e+00 : f32
    %7 = vector.broadcast %cst_7 : f32 to vector<64x64xf32>
    %8 = arith.maximumf %6, %7 : vector<64x64xf32>
    %9 = arith.truncf %8 : vector<64x64xf32> to vector<64x64xbf16>
    %c0_8 = arith.constant 0 : index
    %c0_9 = arith.constant 0 : index
    %10 = vector.load %arg5[%c0_8, %c0_9] : memref<64x64xbf16, #tpu.memory_space<vmem>>, vector<64x64xbf16>
    %cst_10 = arith.constant dense<0.000000e+00> : vector<64x64xf32>
    %11 = tpu.matmul %9, %10, %cst_10 {dimension_numbers = #tpu.dot_dimension_numbers<[1], [0], [0], [1], [0, 0, 1, 1], [], []>} : vector<64x64xbf16>, vector<64x64xbf16>, vector<64x64xf32> -> vector<64x64xf32>
    %c0_11 = arith.constant 0 : index
    %c0_12 = arith.constant 0 : index
    %12 = vector.load %arg6[%c0_11, %c0_12] : memref<1x64xf32, #tpu.memory_space<vmem>>, vector<1x64xf32>
    %13 = vector.broadcast %12 : vector<1x64xf32> to vector<64x64xf32>
    %14 = arith.addf %11, %13 : vector<64x64xf32>
    %cst_13 = arith.constant 0.000000e+00 : f32
    %15 = vector.broadcast %cst_13 : f32 to vector<64x64xf32>
    %16 = arith.maximumf %14, %15 : vector<64x64xf32>
    %17 = arith.truncf %16 : vector<64x64xf32> to vector<64x64xbf16>
    %c0_14 = arith.constant 0 : index
    %c0_15 = arith.constant 0 : index
    %18 = vector.load %arg7[%c0_14, %c0_15] : memref<64x64xbf16, #tpu.memory_space<vmem>>, vector<64x64xbf16>
    %cst_16 = arith.constant dense<0.000000e+00> : vector<64x64xf32>
    %19 = tpu.matmul %17, %18, %cst_16 {dimension_numbers = #tpu.dot_dimension_numbers<[1], [0], [0], [1], [0, 0, 1, 1], [], []>} : vector<64x64xbf16>, vector<64x64xbf16>, vector<64x64xf32> -> vector<64x64xf32>
    %c0_17 = arith.constant 0 : index
    %c0_18 = arith.constant 0 : index
    %20 = vector.load %arg8[%c0_17, %c0_18] : memref<1x64xf32, #tpu.memory_space<vmem>>, vector<1x64xf32>
    %21 = vector.broadcast %20 : vector<1x64xf32> to vector<64x64xf32>
    %22 = arith.addf %19, %21 : vector<64x64xf32>
    %cst_19 = arith.constant 0.000000e+00 : f32
    %23 = vector.broadcast %cst_19 : f32 to vector<64x64xf32>
    %24 = arith.maximumf %22, %23 : vector<64x64xf32>
    %25 = arith.truncf %24 : vector<64x64xf32> to vector<64x64xbf16>
    %c0_20 = arith.constant 0 : index
    %c0_21 = arith.constant 0 : index
    %26 = vector.load %arg9[%c0_20, %c0_21] : memref<64x32xbf16, #tpu.memory_space<vmem>>, vector<64x32xbf16>
    %cst_22 = arith.constant dense<0.000000e+00> : vector<64x32xf32>
    %27 = tpu.matmul %25, %26, %cst_22 {dimension_numbers = #tpu.dot_dimension_numbers<[1], [0], [0], [1], [0, 0, 1, 1], [], []>} : vector<64x64xbf16>, vector<64x32xbf16>, vector<64x32xf32> -> vector<64x32xf32>
    %c0_23 = arith.constant 0 : index
    %c0_24 = arith.constant 0 : index
    %28 = vector.load %arg10[%c0_23, %c0_24] : memref<1x32xf32, #tpu.memory_space<vmem>>, vector<1x32xf32>
    %29 = vector.broadcast %28 : vector<1x32xf32> to vector<64x32xf32>
    %30 = arith.addf %27, %29 : vector<64x32xf32>
    %c0_25 = arith.constant 0 : index
    %c0_26 = arith.constant 0 : index
    %31 = vector.load %arg11[%c0_25, %c0_26] : memref<16x64xbf16, #tpu.memory_space<vmem>>, vector<16x64xbf16>
    %cst_27 = arith.constant dense<0.000000e+00> : vector<64x64xf32>
    %32 = tpu.matmul %0, %31, %cst_27 {dimension_numbers = #tpu.dot_dimension_numbers<[1], [0], [0], [1], [0, 0, 1, 1], [], []>} : vector<64x16xbf16>, vector<16x64xbf16>, vector<64x64xf32> -> vector<64x64xf32>
    %c0_28 = arith.constant 0 : index
    %c0_29 = arith.constant 0 : index
    %33 = vector.load %arg12[%c0_28, %c0_29] : memref<1x64xf32, #tpu.memory_space<vmem>>, vector<1x64xf32>
    %34 = vector.broadcast %33 : vector<1x64xf32> to vector<64x64xf32>
    %35 = arith.addf %32, %34 : vector<64x64xf32>
    %cst_30 = arith.constant 0.000000e+00 : f32
    %36 = vector.broadcast %cst_30 : f32 to vector<64x64xf32>
    %37 = arith.maximumf %35, %36 : vector<64x64xf32>
    %38 = arith.truncf %37 : vector<64x64xf32> to vector<64x64xbf16>
    %c0_31 = arith.constant 0 : index
    %c0_32 = arith.constant 0 : index
    %39 = vector.load %arg13[%c0_31, %c0_32] : memref<64x128xbf16, #tpu.memory_space<vmem>>, vector<64x128xbf16>
    %cst_33 = arith.constant dense<0.000000e+00> : vector<64x128xf32>
    %40 = tpu.matmul %38, %39, %cst_33 {dimension_numbers = #tpu.dot_dimension_numbers<[1], [0], [0], [1], [0, 0, 1, 1], [], []>} : vector<64x64xbf16>, vector<64x128xbf16>, vector<64x128xf32> -> vector<64x128xf32>
    %c0_34 = arith.constant 0 : index
    %c0_35 = arith.constant 0 : index
    %41 = vector.load %arg14[%c0_34, %c0_35] : memref<1x128xf32, #tpu.memory_space<vmem>>, vector<1x128xf32>
    %42 = vector.broadcast %41 : vector<1x128xf32> to vector<64x128xf32>
    %43 = arith.addf %40, %42 : vector<64x128xf32>
    %44 = arith.negf %43 : vector<64x128xf32>
    %45 = math.exp %44 : vector<64x128xf32>
    %cst_36 = arith.constant 1.000000e+00 : f32
    %46 = vector.broadcast %cst_36 : f32 to vector<64x128xf32>
    %47 = arith.addf %46, %45 : vector<64x128xf32>
    %48 = arith.divf %46, %47 : vector<64x128xf32>
    %cst_37 = arith.constant 2.000000e+00 : f32
    %49 = vector.broadcast %cst_37 : f32 to vector<64x128xf32>
    %50 = arith.mulf %49, %48 : vector<64x128xf32>
    %51 = vector.extract_strided_slice %50 {offsets = [0, 0], sizes = [64, 32], strides = [1, 1]} : vector<64x128xf32> to vector<64x32xf32>
    %52 = vector.extract_strided_slice %1 {offsets = [0, 0], sizes = [64, 1], strides = [1, 1]} : vector<64x4xf32> to vector<64x1xf32>
    %53 = vector.broadcast %52 : vector<64x1xf32> to vector<64x32xf32>
    %54 = arith.subf %51, %53 : vector<64x32xf32>
    %55 = arith.mulf %54, %54 : vector<64x32xf32>
    %56 = vector.extract_strided_slice %50 {offsets = [0, 32], sizes = [64, 32], strides = [1, 1]} : vector<64x128xf32> to vector<64x32xf32>
    %57 = vector.extract_strided_slice %1 {offsets = [0, 1], sizes = [64, 1], strides = [1, 1]} : vector<64x4xf32> to vector<64x1xf32>
    %58 = vector.broadcast %57 : vector<64x1xf32> to vector<64x32xf32>
    %59 = arith.subf %56, %58 : vector<64x32xf32>
    %60 = arith.mulf %59, %59 : vector<64x32xf32>
    %61 = arith.addf %55, %60 : vector<64x32xf32>
    %62 = vector.extract_strided_slice %50 {offsets = [0, 64], sizes = [64, 32], strides = [1, 1]} : vector<64x128xf32> to vector<64x32xf32>
    %63 = vector.extract_strided_slice %1 {offsets = [0, 2], sizes = [64, 1], strides = [1, 1]} : vector<64x4xf32> to vector<64x1xf32>
    %64 = vector.broadcast %63 : vector<64x1xf32> to vector<64x32xf32>
    %65 = arith.subf %62, %64 : vector<64x32xf32>
    %66 = arith.mulf %65, %65 : vector<64x32xf32>
    %67 = arith.addf %61, %66 : vector<64x32xf32>
    %68 = vector.extract_strided_slice %50 {offsets = [0, 96], sizes = [64, 32], strides = [1, 1]} : vector<64x128xf32> to vector<64x32xf32>
    %69 = vector.extract_strided_slice %1 {offsets = [0, 3], sizes = [64, 1], strides = [1, 1]} : vector<64x4xf32> to vector<64x1xf32>
    %70 = vector.broadcast %69 : vector<64x1xf32> to vector<64x32xf32>
    %71 = arith.subf %68, %70 : vector<64x32xf32>
    %72 = arith.mulf %71, %71 : vector<64x32xf32>
    %73 = arith.addf %67, %72 : vector<64x32xf32>
    %cst_38 = arith.constant 1.000000e-07 : f32
    %74 = vector.broadcast %cst_38 : f32 to vector<64x32xf32>
    %75 = arith.addf %73, %74 : vector<64x32xf32>
    %76 = math.sqrt %75 : vector<64x32xf32>
    %cst_39 = arith.constant -1.000000e+00 : f32
    %77 = vector.broadcast %cst_39 : f32 to vector<64x32xf32>
    %78 = arith.mulf %76, %77 : vector<64x32xf32>
    %cst_40 = arith.constant dense<0xFF800000> : vector<64xf32>
    %79 = vector.multi_reduction <maximumf>, %78, %cst_40 [1] : vector<64x32xf32> to vector<64xf32>
    %80 = vector.shape_cast %79 : vector<64xf32> to vector<64x1xf32>
    %81 = vector.broadcast %80 : vector<64x1xf32> to vector<64x32xf32>
    %82 = arith.subf %78, %81 : vector<64x32xf32>
    %83 = math.exp %82 : vector<64x32xf32>
    %84 = arith.mulf %83, %30 : vector<64x32xf32>
    %cst_41 = arith.constant dense<0.000000e+00> : vector<64xf32>
    %85 = vector.multi_reduction <add>, %84, %cst_41 [1] : vector<64x32xf32> to vector<64xf32>
    %86 = vector.shape_cast %85 : vector<64xf32> to vector<64x1xf32>
    %cst_42 = arith.constant dense<0.000000e+00> : vector<64xf32>
    %87 = vector.multi_reduction <add>, %83, %cst_42 [1] : vector<64x32xf32> to vector<64xf32>
    %88 = vector.shape_cast %87 : vector<64xf32> to vector<64x1xf32>
    %89 = tpu.reciprocal %88 {approx = true} : vector<64x1xf32> -> vector<64x1xf32>
    %90 = arith.mulf %86, %89 : vector<64x1xf32>
    %c0_43 = arith.constant 0 : index
    %c0_44 = arith.constant 0 : index
    %91 = vector.load %arg15[%c0_43, %c0_44] : memref<64x1xf32, #tpu.memory_space<vmem>>, vector<64x1xf32>
    tpu.vector_store %arg15[%c0_43, %c0_44], %90 {strides = array<i32>} : memref<64x1xf32, #tpu.memory_space<vmem>>, vector<64x1xf32>,
    return
  }
  func.func @transform_0(%arg0: i32) -> (i32, i32) {
    %c0_i32 = arith.constant 0 : i32
    %c0_i32_0 = arith.constant 0 : i32
    return %arg0, %c0_i32 : i32, i32
  }
  func.func @transform_1(%arg0: i32) -> (i32, i32) {
    %c0_i32 = arith.constant 0 : i32
    %c0_i32_0 = arith.constant 0 : i32
    return %arg0, %c0_i32 : i32, i32
  }
  func.func @transform_2(%arg0: i32) -> (i32, i32) {
    %c0_i32 = arith.constant 0 : i32
    %c0_i32_0 = arith.constant 0 : i32
    %c0_i32_1 = arith.constant 0 : i32
    return %c0_i32, %c0_i32_0 : i32, i32
  }
  func.func @transform_3(%arg0: i32) -> (i32, i32) {
    %c0_i32 = arith.constant 0 : i32
    %c0_i32_0 = arith.constant 0 : i32
    %c0_i32_1 = arith.constant 0 : i32
    return %c0_i32, %c0_i32_0 : i32, i32
  }
  func.func @transform_4(%arg0: i32) -> (i32, i32) {
    %c0_i32 = arith.constant 0 : i32
    %c0_i32_0 = arith.constant 0 : i32
    %c0_i32_1 = arith.constant 0 : i32
    return %c0_i32, %c0_i32_0 : i32, i32
  }
  func.func @transform_5(%arg0: i32) -> (i32, i32) {
    %c0_i32 = arith.constant 0 : i32
    %c0_i32_0 = arith.constant 0 : i32
    %c0_i32_1 = arith.constant 0 : i32
    return %c0_i32, %c0_i32_0 : i32, i32
  }
  func.func @transform_6(%arg0: i32) -> (i32, i32) {
    %c0_i32 = arith.constant 0 : i32
    %c0_i32_0 = arith.constant 0 : i32
    %c0_i32_1 = arith.constant 0 : i32
    return %c0_i32, %c0_i32_0 : i32, i32
  }
  func.func @transform_7(%arg0: i32) -> (i32, i32) {
    %c0_i32 = arith.constant 0 : i32
    %c0_i32_0 = arith.constant 0 : i32
    %c0_i32_1 = arith.constant 0 : i32
    return %c0_i32, %c0_i32_0 : i32, i32
  }
  func.func @transform_8(%arg0: i32) -> (i32, i32) {
    %c0_i32 = arith.constant 0 : i32
    %c0_i32_0 = arith.constant 0 : i32
    %c0_i32_1 = arith.constant 0 : i32
    return %c0_i32, %c0_i32_0 : i32, i32
  }
  func.func @transform_9(%arg0: i32) -> (i32, i32) {
    %c0_i32 = arith.constant 0 : i32
    %c0_i32_0 = arith.constant 0 : i32
    %c0_i32_1 = arith.constant 0 : i32
    return %c0_i32, %c0_i32_0 : i32, i32
  }
  func.func @transform_10(%arg0: i32) -> (i32, i32) {
    %c0_i32 = arith.constant 0 : i32
    %c0_i32_0 = arith.constant 0 : i32
    %c0_i32_1 = arith.constant 0 : i32
    return %c0_i32, %c0_i32_0 : i32, i32
  }
  func.func @transform_11(%arg0: i32) -> (i32, i32) {
    %c0_i32 = arith.constant 0 : i32
    %c0_i32_0 = arith.constant 0 : i32
    %c0_i32_1 = arith.constant 0 : i32
    return %c0_i32, %c0_i32_0 : i32, i32
  }
  func.func @transform_12(%arg0: i32) -> (i32, i32) {
    %c0_i32 = arith.constant 0 : i32
    %c0_i32_0 = arith.constant 0 : i32
    %c0_i32_1 = arith.constant 0 : i32
    return %c0_i32, %c0_i32_0 : i32, i32
  }
  func.func @transform_13(%arg0: i32) -> (i32, i32) {
    %c0_i32 = arith.constant 0 : i32
    %c0_i32_0 = arith.constant 0 : i32
    %c0_i32_1 = arith.constant 0 : i32
    return %c0_i32, %c0_i32_0 : i32, i32
  }
  func.func @transform_14(%arg0: i32) -> (i32, i32) {
    %c0_i32 = arith.constant 0 : i32
    %c0_i32_0 = arith.constant 0 : i32
    return %arg0, %c0_i32 : i32, i32
  }
}

</mosaic_0001>

<llo_original>
// kernel: rbfdqn_forward.1
$region0: #{rbfdqn_forward.1}
  #allocation0 [shape = 'u32[]', space=smem, size = 0x4, offset = 0x4, fixed_abs, tag = 'smem constant byte address 0x4 - core index']
  #allocation1 [shape = 'u32[144,128]{1,0:T(1,128)}', space=vmem, size = 0x12000, scoped, tag = 'internal scratch']
  %s0 = inlined_call_operand.vmem [shape: bf16[128,16], index: 0, kind: input, shape index: {}]
  %s1 = inlined_call_operand.vmem [shape: f32[128,4], index: 1, kind: input, shape index: {}]
  %s2 = inlined_call_operand.vmem [shape: bf16[16,64], index: 2, kind: input, shape index: {}]
  %s3 = inlined_call_operand.vmem [shape: f32[1,64], index: 3, kind: input, shape index: {}]
  %s4 = inlined_call_operand.vmem [shape: bf16[64,64], index: 4, kind: input, shape index: {}]
  %s5 = inlined_call_operand.vmem [shape: f32[1,64], index: 5, kind: input, shape index: {}]
  %s6 = inlined_call_operand.vmem [shape: bf16[64,64], index: 6, kind: input, shape index: {}]
  %s7 = inlined_call_operand.vmem [shape: f32[1,64], index: 7, kind: input, shape index: {}]
  %s8 = inlined_call_operand.vmem [shape: bf16[64,32], index: 8, kind: input, shape index: {}]
  %s9 = inlined_call_operand.vmem [shape: f32[1,32], index: 9, kind: input, shape index: {}]
  %s10 = inlined_call_operand.vmem [shape: bf16[16,64], index: 10, kind: input, shape index: {}]
  %s11 = inlined_call_operand.vmem [shape: f32[1,64], index: 11, kind: input, shape index: {}]
  %s12 = inlined_call_operand.vmem [shape: bf16[64,128], index: 12, kind: input, shape index: {}]
  %s13 = inlined_call_operand.vmem [shape: f32[1,128], index: 13, kind: input, shape index: {}]
  %s14 = inlined_call_operand.vmem [shape: f32[128,1], index: 14, kind: output, shape index: {}]
  %s15 = sld [smem:[#allocation0]]
  $region89: #{rbfdqn_forward.1} parent=0
    _
  %s17 = ssub.s32 1, %s15
  %s18 = scalar_select 0, %s17, %s15
  loop: start=0, step=1, limit=4
  $region2: #{rbfdqn_forward.1} parent=0 // loop_pre_header
    _
  $region3: #{rbfdqn_forward.1} parent=0 // loop_header
    %s20 = sphi 0, %s24
    %p21 = scmp.ge.s32.totalorder %s20, 4
    %s30 = sphi 0, %s32
    %s33 = sphi 0, %s30
    %s34 = sphi 0, %s33
    %s50 = sphi 0, %s34
    %s56 = sphi 0, %s58
    %s59 = sphi 0, %s56
    %s60 = sphi 0, %s59
    %s76 = sphi 0, %s60
    %s80 = sphi 0, %s80
    %s82 = sphi 0, %s80
    %s83 = sphi 0, %s82
    %s97 = sphi 0, %s83
    %s101 = sphi 0, %s101
    %s103 = sphi 0, %s101
    %s104 = sphi 0, %s103
    %s118 = sphi 0, %s104
    %s122 = sphi 0, %s122
    %s124 = sphi 0, %s122
    %s125 = sphi 0, %s124
    %s139 = sphi 0, %s125
    %s143 = sphi 0, %s143
    %s145 = sphi 0, %s143
    %s146 = sphi 0, %s145
    %s160 = sphi 0, %s146
    %s164 = sphi 0, %s164
    %s166 = sphi 0, %s164
    %s167 = sphi 0, %s166
    %s181 = sphi 0, %s167
    %s185 = sphi 0, %s185
    %s187 = sphi 0, %s185
    %s188 = sphi 0, %s187
    %s202 = sphi 0, %s188
    %s206 = sphi 0, %s206
    %s208 = sphi 0, %s206
    %s209 = sphi 0, %s208
    %s223 = sphi 0, %s209
    %s227 = sphi 0, %s227
    %s229 = sphi 0, %s227
    %s230 = sphi 0, %s229
    %s244 = sphi 0, %s230
    %s248 = sphi 0, %s248
    %s250 = sphi 0, %s248
    %s251 = sphi 0, %s250
    %s265 = sphi 0, %s251
    %s269 = sphi 0, %s269
    %s271 = sphi 0, %s269
    %s272 = sphi 0, %s271
    %s286 = sphi 0, %s272
    %s290 = sphi 0, %s290
    %s292 = sphi 0, %s290
    %s293 = sphi 0, %s292
    %s307 = sphi 0, %s293
    %s311 = sphi 0, %s311
    %s313 = sphi 0, %s311
    %s314 = sphi 0, %s313
    %s328 = sphi 0, %s314
    %s334 = sphi 0, %s336
    %s337 = sphi 0, %s334
    %s338 = sphi 0, %s337
    %s354 = sphi 0, %s338
  $region4: #{rbfdqn_forward.1} parent=0 // loop_header_branch
    %23 = sbr.rel (%p21) target = $region8
  $region5: #{rbfdqn_forward.1} parent=0 // loop_body
    %s25 = ssub.s32 %s20, 1
    %s26 = ssub.s32 %s20, 2
    %s27 = sadd.s32 %s20, 1
    %s28 = ssub.s32 %s20, %s27
    %p29 = scmp.eq.s32.totalorder %s28, 0
    %s31 = sadd.s32 %s30, 1
    %s32 = scalar_select %p29, %s30, %s31
    %p35 = pneg %p29
    %p36 = scmp.eq.s32.totalorder %s20, 1
    %p37 = por %p35, %p36
    %p38 = scmp.ne.s32.totalorder %s30, %s33
    %p39 = scmp.eq.s32.totalorder %s20, 0
    %p40 = por %p38, %p39
    %p41 = scmp.ne.s32.totalorder %s30, %s33
    %p42 = scmp.eq.s32.totalorder %s25, 1
    %p43 = por %p41, %p42
    %p44 = scmp.ne.s32.totalorder %s33, %s34
    %p45 = scmp.eq.s32.totalorder %s25, 0
    %p46 = por %p44, %p45
    %p47 = scmp.ne.s32.totalorder %s33, %s34
    %p48 = scmp.eq.s32.totalorder %s26, 1
    %p49 = por %p47, %p48
    %p51 = scmp.ne.s32.totalorder %s34, %s50
    %p52 = scmp.eq.s32.totalorder %s26, 0
    %p53 = por %p51, %p52
    %s54 = ssub.s32 %s20, %s27
    %p55 = scmp.eq.s32.totalorder %s54, 0
    %s57 = sadd.s32 %s56, 1
    %s58 = scalar_select %p55, %s56, %s57
    %p61 = pneg %p55
    %p62 = scmp.eq.s32.totalorder %s20, 1
    %p63 = por %p61, %p62
    %p64 = scmp.ne.s32.totalorder %s56, %s59
    %p65 = scmp.eq.s32.totalorder %s20, 0
    %p66 = por %p64, %p65
    %p67 = scmp.ne.s32.totalorder %s56, %s59
    %p68 = scmp.eq.s32.totalorder %s25, 1
    %p69 = por %p67, %p68
    %p70 = scmp.ne.s32.totalorder %s59, %s60
    %p71 = scmp.eq.s32.totalorder %s25, 0
    %p72 = por %p70, %p71
    %p73 = scmp.ne.s32.totalorder %s59, %s60
    %p74 = scmp.eq.s32.totalorder %s26, 1
    %p75 = por %p73, %p74
    %p77 = scmp.ne.s32.totalorder %s60, %s76
    %p78 = scmp.eq.s32.totalorder %s26, 0
    %p79 = por %p77, %p78
    %s81 = sadd.s32 %s80, 1
    %p84 = scmp.eq.s32.totalorder %s20, 1
    %p85 = scmp.ne.s32.totalorder %s80, %s82
    %p86 = scmp.eq.s32.totalorder %s20, 0
    %p87 = por %p85, %p86
    %p88 = scmp.ne.s32.totalorder %s80, %s82
    %p89 = scmp.eq.s32.totalorder %s25, 1
    %p90 = por %p88, %p89
    %p91 = scmp.ne.s32.totalorder %s82, %s83
    %p92 = scmp.eq.s32.totalorder %s25, 0
    %p93 = por %p91, %p92
    %p94 = scmp.ne.s32.totalorder %s82, %s83
    %p95 = scmp.eq.s32.totalorder %s26, 1
    %p96 = por %p94, %p95
    %p98 = scmp.ne.s32.totalorder %s83, %s97
    %p99 = scmp.eq.s32.totalorder %s26, 0
    %p100 = por %p98, %p99
    %s102 = sadd.s32 %s101, 1
    %p105 = scmp.eq.s32.totalorder %s20, 1
    %p106 = scmp.ne.s32.totalorder %s101, %s103
    %p107 = scmp.eq.s32.totalorder %s20, 0
    %p108 = por %p106, %p107
    %p109 = scmp.ne.s32.totalorder %s101, %s103
    %p110 = scmp.eq.s32.totalorder %s25, 1
    %p111 = por %p109, %p110
    %p112 = scmp.ne.s32.totalorder %s103, %s104
    %p113 = scmp.eq.s32.totalorder %s25, 0
    %p114 = por %p112, %p113
    %p115 = scmp.ne.s32.totalorder %s103, %s104
    %p116 = scmp.eq.s32.totalorder %s26, 1
    %p117 = por %p115, %p116
    %p119 = scmp.ne.s32.totalorder %s104, %s118
    %p120 = scmp.eq.s32.totalorder %s26, 0
    %p121 = por %p119, %p120
    %s123 = sadd.s32 %s122, 1
    %p126 = scmp.eq.s32.totalorder %s20, 1
    %p127 = scmp.ne.s32.totalorder %s122, %s124
    %p128 = scmp.eq.s32.totalorder %s20, 0
    %p129 = por %p127, %p128
    %p130 = scmp.ne.s32.totalorder %s122, %s124
    %p131 = scmp.eq.s32.totalorder %s25, 1
    %p132 = por %p130, %p131
    %p133 = scmp.ne.s32.totalorder %s124, %s125
    %p134 = scmp.eq.s32.totalorder %s25, 0
    %p135 = por %p133, %p134
    %p136 = scmp.ne.s32.totalorder %s124, %s125
    %p137 = scmp.eq.s32.totalorder %s26, 1
    %p138 = por %p136, %p137
    %p140 = scmp.ne.s32.totalorder %s125, %s139
    %p141 = scmp.eq.s32.totalorder %s26, 0
    %p142 = por %p140, %p141
    %s144 = sadd.s32 %s143, 1
    %p147 = scmp.eq.s32.totalorder %s20, 1
    %p148 = scmp.ne.s32.totalorder %s143, %s145
    %p149 = scmp.eq.s32.totalorder %s20, 0
    %p150 = por %p148, %p149
    %p151 = scmp.ne.s32.totalorder %s143, %s145
    %p152 = scmp.eq.s32.totalorder %s25, 1
    %p153 = por %p151, %p152
    %p154 = scmp.ne.s32.totalorder %s145, %s146
    %p155 = scmp.eq.s32.totalorder %s25, 0
    %p156 = por %p154, %p155
    %p157 = scmp.ne.s32.totalorder %s145, %s146
    %p158 = scmp.eq.s32.totalorder %s26, 1
    %p159 = por %p157, %p158
    %p161 = scmp.ne.s32.totalorder %s146, %s160
    %p162 = scmp.eq.s32.totalorder %s26, 0
    %p163 = por %p161, %p162
    %s165 = sadd.s32 %s164, 1
    %p168 = scmp.eq.s32.totalorder %s20, 1
    %p169 = scmp.ne.s32.totalorder %s164, %s166
    %p170 = scmp.eq.s32.totalorder %s20, 0
    %p171 = por %p169, %p170
    %p172 = scmp.ne.s32.totalorder %s164, %s166
    %p173 = scmp.eq.s32.totalorder %s25, 1
    %p174 = por %p172, %p173
    %p175 = scmp.ne.s32.totalorder %s166, %s167
    %p176 = scmp.eq.s32.totalorder %s25, 0
    %p177 = por %p175, %p176
    %p178 = scmp.ne.s32.totalorder %s166, %s167
    %p179 = scmp.eq.s32.totalorder %s26, 1
    %p180 = por %p178, %p179
    %p182 = scmp.ne.s32.totalorder %s167, %s181
    %p183 = scmp.eq.s32.totalorder %s26, 0
    %p184 = por %p182, %p183
    %s186 = sadd.s32 %s185, 1
    %p189 = scmp.eq.s32.totalorder %s20, 1
    %p190 = scmp.ne.s32.totalorder %s185, %s187
    %p191 = scmp.eq.s32.totalorder %s20, 0
    %p192 = por %p190, %p191
    %p193 = scmp.ne.s32.totalorder %s185, %s187
    %p194 = scmp.eq.s32.totalorder %s25, 1
    %p195 = por %p193, %p194
    %p196 = scmp.ne.s32.totalorder %s187, %s188
    %p197 = scmp.eq.s32.totalorder %s25, 0
    %p198 = por %p196, %p197
    %p199 = scmp.ne.s32.totalorder %s187, %s188
    %p200 = scmp.eq.s32.totalorder %s26, 1
    %p201 = por %p199, %p200
    %p203 = scmp.ne.s32.totalorder %s188, %s202
    %p204 = scmp.eq.s32.totalorder %s26, 0
    %p205 = por %p203, %p204
    %s207 = sadd.s32 %s206, 1
    %p210 = scmp.eq.s32.totalorder %s20, 1
    %p211 = scmp.ne.s32.totalorder %s206, %s208
    %p212 = scmp.eq.s32.totalorder %s20, 0
    %p213 = por %p211, %p212
    %p214 = scmp.ne.s32.totalorder %s206, %s208
    %p215 = scmp.eq.s32.totalorder %s25, 1
    %p216 = por %p214, %p215
    %p217 = scmp.ne.s32.totalorder %s208, %s209
    %p218 = scmp.eq.s32.totalorder %s25, 0
    %p219 = por %p217, %p218
    %p220 = scmp.ne.s32.totalorder %s208, %s209
    %p221 = scmp.eq.s32.totalorder %s26, 1
    %p222 = por %p220, %p221
    %p224 = scmp.ne.s32.totalorder %s209, %s223
    %p225 = scmp.eq.s32.totalorder %s26, 0
    %p226 = por %p224, %p225
    %s228 = sadd.s32 %s227, 1
    %p231 = scmp.eq.s32.totalorder %s20, 1
    %p232 = scmp.ne.s32.totalorder %s227, %s229
    %p233 = scmp.eq.s32.totalorder %s20, 0
    %p234 = por %p232, %p233
    %p235 = scmp.ne.s32.totalorder %s227, %s229
    %p236 = scmp.eq.s32.totalorder %s25, 1
    %p237 = por %p235, %p236
    %p238 = scmp.ne.s32.totalorder %s229, %s230
    %p239 = scmp.eq.s32.totalorder %s25, 0
    %p240 = por %p238, %p239
    %p241 = scmp.ne.s32.totalorder %s229, %s230
    %p242 = scmp.eq.s32.totalorder %s26, 1
    %p243 = por %p241, %p242
    %p245 = scmp.ne.s32.totalorder %s230, %s244
    %p246 = scmp.eq.s32.totalorder %s26, 0
    %p247 = por %p245, %p246
    %s249 = sadd.s32 %s248, 1
    %p252 = scmp.eq.s32.totalorder %s20, 1
    %p253 = scmp.ne.s32.totalorder %s248, %s250
    %p254 = scmp.eq.s32.totalorder %s20, 0
    %p255 = por %p253, %p254
    %p256 = scmp.ne.s32.totalorder %s248, %s250
    %p257 = scmp.eq.s32.totalorder %s25, 1
    %p258 = por %p256, %p257
    %p259 = scmp.ne.s32.totalorder %s250, %s251
    %p260 = scmp.eq.s32.totalorder %s25, 0
    %p261 = por %p259, %p260
    %p262 = scmp.ne.s32.totalorder %s250, %s251
    %p263 = scmp.eq.s32.totalorder %s26, 1
    %p264 = por %p262, %p263
    %p266 = scmp.ne.s32.totalorder %s251, %s265
    %p267 = scmp.eq.s32.totalorder %s26, 0
    %p268 = por %p266, %p267
    %s270 = sadd.s32 %s269, 1
    %p273 = scmp.eq.s32.totalorder %s20, 1
    %p274 = scmp.ne.s32.totalorder %s269, %s271
    %p275 = scmp.eq.s32.totalorder %s20, 0
    %p276 = por %p274, %p275
    %p277 = scmp.ne.s32.totalorder %s269, %s271
    %p278 = scmp.eq.s32.totalorder %s25, 1
    %p279 = por %p277, %p278
    %p280 = scmp.ne.s32.totalorder %s271, %s272
    %p281 = scmp.eq.s32.totalorder %s25, 0
    %p282 = por %p280, %p281
    %p283 = scmp.ne.s32.totalorder %s271, %s272
    %p284 = scmp.eq.s32.totalorder %s26, 1
    %p285 = por %p283, %p284
    %p287 = scmp.ne.s32.totalorder %s272, %s286
    %p288 = scmp.eq.s32.totalorder %s26, 0
    %p289 = por %p287, %p288
    %s291 = sadd.s32 %s290, 1
    %p294 = scmp.eq.s32.totalorder %s20, 1
    %p295 = scmp.ne.s32.totalorder %s290, %s292
    %p296 = scmp.eq.s32.totalorder %s20, 0
    %p297 = por %p295, %p296
    %p298 = scmp.ne.s32.totalorder %s290, %s292
    %p299 = scmp.eq.s32.totalorder %s25, 1
    %p300 = por %p298, %p299
    %p301 = scmp.ne.s32.totalorder %s292, %s293
    %p302 = scmp.eq.s32.totalorder %s25, 0
    %p303 = por %p301, %p302
    %p304 = scmp.ne.s32.totalorder %s292, %s293
    %p305 = scmp.eq.s32.totalorder %s26, 1
    %p306 = por %p304, %p305
    %p308 = scmp.ne.s32.totalorder %s293, %s307
    %p309 = scmp.eq.s32.totalorder %s26, 0
    %p310 = por %p308, %p309
    %s312 = sadd.s32 %s311, 1
    %p315 = scmp.eq.s32.totalorder %s20, 1
    %p316 = scmp.ne.s32.totalorder %s311, %s313
    %p317 = scmp.eq.s32.totalorder %s20, 0
    %p318 = por %p316, %p317
    %p319 = scmp.ne.s32.totalorder %s311, %s313
    %p320 = scmp.eq.s32.totalorder %s25, 1
    %p321 = por %p319, %p320
    %p322 = scmp.ne.s32.totalorder %s313, %s314
    %p323 = scmp.eq.s32.totalorder %s25, 0
    %p324 = por %p322, %p323
    %p325 = scmp.ne.s32.totalorder %s313, %s314
    %p326 = scmp.eq.s32.totalorder %s26, 1
    %p327 = por %p325, %p326
    %p329 = scmp.ne.s32.totalorder %s314, %s328
    %p330 = scmp.eq.s32.totalorder %s26, 0
    %p331 = por %p329, %p330
    %s332 = ssub.s32 %s20, %s27
    %p333 = scmp.eq.s32.totalorder %s332, 0
    %s335 = sadd.s32 %s334, 1
    %s336 = scalar_select %p333, %s334, %s335
    %p339 = pneg %p333
    %p340 = scmp.eq.s32.totalorder %s20, 1
    %p341 = por %p339, %p340
    %p342 = scmp.ne.s32.totalorder %s334, %s337
    %p343 = scmp.eq.s32.totalorder %s20, 0
    %p344 = por %p342, %p343
    %p345 = scmp.ne.s32.totalorder %s334, %s337
    %p346 = scmp.eq.s32.totalorder %s25, 1
    %p347 = por %p345, %p346
    %p348 = scmp.ne.s32.totalorder %s337, %s338
    %p349 = scmp.eq.s32.totalorder %s25, 0
    %p350 = por %p348, %p349
    %p351 = scmp.ne.s32.totalorder %s337, %s338
    %p352 = scmp.eq.s32.totalorder %s26, 1
    %p353 = por %p351, %p352
    %p355 = scmp.ne.s32.totalorder %s338, %s354
    %p356 = scmp.eq.s32.totalorder %s26, 0
    %p357 = por %p355, %p356
    %p358 = scmp.le.s32.totalorder 1, %s20
    %p359 = scmp.lt.s32.totalorder %s20, 3
    %p360 = pnand %p358, %p359
    %p361 = pneg %p360
    // Predicated region
    $region9: #{rbfdqn_forward.1} parent=5 // pred_check
      _
    $region10: #{rbfdqn_forward.1} parent=5 // pred_check_branch
      %363 = sbr.rel (%p360) target = $region12
    $region11: #{rbfdqn_forward.1} parent=5 // pred_region
      %s364 = ssub.s32 %s20, 1
      // Predicated region
      $region13: #{rbfdqn_forward.1} parent=11 // pred_check
        %p365 = pneg %p93
      $region14: #{rbfdqn_forward.1} parent=11 // pred_check_branch
        %367 = sbr.rel (%p365) target = $region16
      $region15: #{rbfdqn_forward.1} parent=11 // pred_region
        _
      $region16: #{rbfdqn_forward.1} parent=11 // pred_fallthru
        _
      // Predicated region
      $region17: #{rbfdqn_forward.1} parent=11 // pred_check
        %p368 = pneg %p114
      $region18: #{rbfdqn_forward.1} parent=11 // pred_check_branch
        %370 = sbr.rel (%p368) target = $region20
      $region19: #{rbfdqn_forward.1} parent=11 // pred_region
        _
      $region20: #{rbfdqn_forward.1} parent=11 // pred_fallthru
        _
      // Predicated region
      $region21: #{rbfdqn_forward.1} parent=11 // pred_check
        %p371 = pneg %p135
      $region22: #{rbfdqn_forward.1} parent=11 // pred_check_branch
        %373 = sbr.rel (%p371) target = $region24
      $region23: #{rbfdqn_forward.1} parent=11 // pred_region
        _
      $region24: #{rbfdqn_forward.1} parent=11 // pred_fallthru
        _
      // Predicated region
      $region25: #{rbfdqn_forward.1} parent=11 // pred_check
        %p374 = pneg %p156
      $region26: #{rbfdqn_forward.1} parent=11 // pred_check_branch
        %376 = sbr.rel (%p374) target = $region28
      $region27: #{rbfdqn_forward.1} parent=11 // pred_region
        _
      $region28: #{rbfdqn_forward.1} parent=11 // pred_fallthru
        _
      // Predicated region
      $region29: #{rbfdqn_forward.1} parent=11 // pred_check
        %p377 = pneg %p177
      $region30: #{rbfdqn_forward.1} parent=11 // pred_check_branch
        %379 = sbr.rel (%p377) target = $region32
      $region31: #{rbfdqn_forward.1} parent=11 // pred_region
        _
      $region32: #{rbfdqn_forward.1} parent=11 // pred_fallthru
        _
      // Predicated region
      $region33: #{rbfdqn_forward.1} parent=11 // pred_check
        %p380 = pneg %p198
      $region34: #{rbfdqn_forward.1} parent=11 // pred_check_branch
        %382 = sbr.rel (%p380) target = $region36
      $region35: #{rbfdqn_forward.1} parent=11 // pred_region
        _
      $region36: #{rbfdqn_forward.1} parent=11 // pred_fallthru
        _
      // Predicated region
      $region37: #{rbfdqn_forward.1} parent=11 // pred_check
        %p383 = pneg %p219
      $region38: #{rbfdqn_forward.1} parent=11 // pred_check_branch
        %385 = sbr.rel (%p383) target = $region40
      $region39: #{rbfdqn_forward.1} parent=11 // pred_region
        _
      $region40: #{rbfdqn_forward.1} parent=11 // pred_fallthru
        _
      // Predicated region
      $region41: #{rbfdqn_forward.1} parent=11 // pred_check
        %p386 = pneg %p240
      $region42: #{rbfdqn_forward.1} parent=11 // pred_check_branch
        %388 = sbr.rel (%p386) target = $region44
      $region43: #{rbfdqn_forward.1} parent=11 // pred_region
        _
      $region44: #{rbfdqn_forward.1} parent=11 // pred_fallthru
        _
      // Predicated region
      $region45: #{rbfdqn_forward.1} parent=11 // pred_check
        %p389 = pneg %p261
      $region46: #{rbfdqn_forward.1} parent=11 // pred_check_branch
        %391 = sbr.rel (%p389) target = $region48
      $region47: #{rbfdqn_forward.1} parent=11 // pred_region
        _
      $region48: #{rbfdqn_forward.1} parent=11 // pred_fallthru
        _
      // Predicated region
      $region49: #{rbfdqn_forward.1} parent=11 // pred_check
        %p392 = pneg %p282
      $region50: #{rbfdqn_forward.1} parent=11 // pred_check_branch
        %394 = sbr.rel (%p392) target = $region52
      $region51: #{rbfdqn_forward.1} parent=11 // pred_region
        _
      $region52: #{rbfdqn_forward.1} parent=11 // pred_fallthru
        _
      // Predicated region
      $region53: #{rbfdqn_forward.1} parent=11 // pred_check
        %p395 = pneg %p303
      $region54: #{rbfdqn_forward.1} parent=11 // pred_check_branch
        %397 = sbr.rel (%p395) target = $region56
      $region55: #{rbfdqn_forward.1} parent=11 // pred_region
        _
      $region56: #{rbfdqn_forward.1} parent=11 // pred_fallthru
        _
      // Predicated region
      $region57: #{rbfdqn_forward.1} parent=11 // pred_check
        %p398 = pneg %p324
      $region58: #{rbfdqn_forward.1} parent=11 // pred_check_branch
        %400 = sbr.rel (%p398) target = $region60
      $region59: #{rbfdqn_forward.1} parent=11 // pred_region
        _
      $region60: #{rbfdqn_forward.1} parent=11 // pred_fallthru
        _
    $region12: #{rbfdqn_forward.1} parent=5 // pred_fallthru
      _
    %p401 = scmp.lt.s32.totalorder %s20, 2
    // Predicated region
    $region61: #{rbfdqn_forward.1} parent=5 // pred_check
      %p402 = pneg %p401
    $region62: #{rbfdqn_forward.1} parent=5 // pred_check_branch
      %404 = sbr.rel (%p402) target = $region64
    $region63: #{rbfdqn_forward.1} parent=5 // pred_region
      // Predicated region
      $region65: #{rbfdqn_forward.1} parent=63 // pred_check
        %p405 = pneg %p40
      $region66: #{rbfdqn_forward.1} parent=63 // pred_check_branch
        %407 = sbr.rel (%p405) target = $region68
      $region67: #{rbfdqn_forward.1} parent=63 // pred_region
        %s408 = smul.u32 8, %s20
        %p409 = scmp.lt.s32.totalorder %s408, 15
        %s410 = scalar_select %p409, %s408, 15
        %s411 = smul.addr %s410, 4
        %s412 = scalar_lea.vmem %s0, %s411
        %s413 = smul.u32 8, %s20
      $region68: #{rbfdqn_forward.1} parent=63 // pred_fallthru
        _
      // Predicated region
      $region69: #{rbfdqn_forward.1} parent=63 // pred_check
        %p414 = pneg %p66
      $region70: #{rbfdqn_forward.1} parent=63 // pred_check_branch
        %416 = sbr.rel (%p414) target = $region72
      $region71: #{rbfdqn_forward.1} parent=63 // pred_region
        %s417 = smul.u32 8, %s20
        %p418 = scmp.lt.s32.totalorder %s417, 15
        %s419 = scalar_select %p418, %s417, 15
        %s420 = smul.addr %s419, 8
        %s421 = scalar_lea.vmem %s1, %s420
        %s422 = smul.u32 8, %s20
      $region72: #{rbfdqn_forward.1} parent=63 // pred_fallthru
        _
    $region64: #{rbfdqn_forward.1} parent=5 // pred_fallthru
      _
    %p423 = scmp.le.s32.totalorder 1, %s20
    %p424 = scmp.lt.s32.totalorder %s20, 3
    %p425 = pnand %p423, %p424
    %p426 = pneg %p425
    // Predicated region
    $region73: #{rbfdqn_forward.1} parent=5 // pred_check
      _
    $region74: #{rbfdqn_forward.1} parent=5 // pred_check_branch
      %428 = sbr.rel (%p425) target = $region76
    $region75: #{rbfdqn_forward.1} parent=5 // pred_region
      %s429 = ssub.s32 %s20, 1
      %s430 = smul.u32 8, %s25
      %p431 = scmp.lt.s32.totalorder %s430, 15
      %s432 = scalar_select %p431, %s430, 15
      %s433 = smul.addr %s432, 4
      %s434 = scalar_lea.vmem %s0, %s433
      %p435 = pneg %p46
      %p436 = pneg %p43
      %s437 = smul.u32 8, %s25
      %p438 = scmp.lt.s32.totalorder %s437, 15
      %s439 = scalar_select %p438, %s437, 15
      %s440 = smul.addr %s439, 8
      %s441 = scalar_lea.vmem %s1, %s440
      %p442 = pneg %p72
      %p443 = pneg %p69
      %p444 = pneg %p93
      %p445 = pneg %p90
      %p446 = pneg %p114
      %p447 = pneg %p111
      %p448 = pneg %p135
      %p449 = pneg %p132
      %p450 = pneg %p156
      %p451 = pneg %p153
      %p452 = pneg %p177
      %p453 = pneg %p174
      %p454 = pneg %p198
      %p455 = pneg %p195
      %p456 = pneg %p219
      %p457 = pneg %p216
      %p458 = pneg %p240
      %p459 = pneg %p237
      %p460 = pneg %p261
      %p461 = pneg %p258
      %p462 = pneg %p282
      %p463 = pneg %p279
      %p464 = pneg %p303
      %p465 = pneg %p300
      %p466 = pneg %p324
      %p467 = pneg %p321
      %p468 = pneg %p350
      %p469 = pneg %p347
      %s470 = smul.u32 8, %s25
      %p471 = scmp.lt.s32.totalorder %s470, 15
      %s472 = scalar_select %p471, %s470, 15
      %s473 = smul.addr %s472, 8
      %s474 = scalar_lea.vmem %s14, %s473
      %s475 = smul.u32 8, %s25
      %p476 = scmp.lt.s32.totalorder %s475, 15
      %s477 = scalar_select %p476, %s475, 15
      %s478 = smul.addr %s477, 4
      %s479 = scalar_lea.vmem %s0, %s478
      %s480 = smul.u32 8, %s25
      %s481 = smul.u32 8, %s25
      %p482 = scmp.lt.s32.totalorder %s481, 15
      %s483 = scalar_select %p482, %s481, 15
      %s484 = smul.addr %s483, 8
      %s485 = scalar_lea.vmem %s1, %s484
      %s486 = smul.u32 8, %s25
      %s487 = smul.u32 8, %s25
      %p488 = scmp.lt.s32.totalorder %s487, 15
      %s489 = scalar_select %p488, %s487, 15
      %s490 = smul.addr %s489, 8
      %s491 = scalar_lea.vmem %s14, %s490
      %s492 = smul.u32 8, %s25
      %v494 = vld [vmem:[%s479] sm:$0xf]
      %v495 = vld [vmem:[%s479 + $0x4] sm:$0xf]
      %v496 = vld [vmem:[%s479 + $0x8] sm:$0xf]
      %v497 = vld [vmem:[%s479 + $0xc] sm:$0xf]
      %v498 = vld [vmem:[%s479 + $0x10] sm:$0xf]
      %v499 = vld [vmem:[%s479 + $0x14] sm:$0xf]
      %v500 = vld [vmem:[%s479 + $0x18] sm:$0xf]
      %v501 = vld [vmem:[%s479 + $0x1c] sm:$0xf]
      %v502 = vld [vmem:[%s485] sm:$0xff]
      %v503 = vld [vmem:[%s485 + $0x8] sm:$0xff]
      %v504 = vld [vmem:[%s485 + $0x10] sm:$0xff]
      %v505 = vld [vmem:[%s485 + $0x18] sm:$0xff]
      %v506 = vld [vmem:[%s485 + $0x20] sm:$0xff]
      %v507 = vld [vmem:[%s485 + $0x28] sm:$0xff]
      %v508 = vld [vmem:[%s485 + $0x30] sm:$0xff]
      %v509 = vld [vmem:[%s485 + $0x38] sm:$0xff]
      %v510 = vld [vmem:[%s2] sm:$0xf]
      %v511 = vld [vmem:[%s2 + $0x4] sm:$0xf]
      %v512 = vld [vmem:[%s3] sm:$0x1]
      %v514 = vlaneseq
      %v515 = vshrl.u32 %v514, 7
      %v516 = vsub.s32 0, %v515
      %v517 = vrot.slane %v512, %v516
      %v527 = vunpack.c.l.b16 %v494
      %v528 = vunpack.c.l.b16 %v495
      %v529 = vunpack.c.l.b16 %v496
      %v530 = vunpack.c.l.b16 %v497
      %v531 = vunpack.c.l.b16 %v498
      %v532 = vunpack.c.l.b16 %v499
      %v533 = vunpack.c.l.b16 %v500
      %v534 = vunpack.c.l.b16 %v501
      %v535 = vpack.c.b16 %v528, %v527
      %v536 = vpack.c.b16 %v530, %v529
      %v537 = vpack.c.b16 %v532, %v531
      %v538 = vpack.c.b16 %v534, %v533
      %v541 = vunpack.c.l.b16 %v510
      %v542 = vunpack.c.l.b16 %v511
      %v543 = vpack.c.b16 %v542, %v541
      %vm545 = vcmask 130048
      %v547 = vsel %vm545, %v535, 0
      %v550 = vsel %vm545, %v536, 0
      %v553 = vsel %vm545, %v537, 0
      %v556 = vsel %vm545, %v538, 0
      %558 = vmatprep.subr.bf16.mxu0 0
      %559 = vmatpush1.bf16.msra.mxu0 0
      %560 = vmatprep.subr.bf16.mxu0 0
      %561 = vmatpush1.bf16.msra.mxu0 0
      %562 = vmatprep.subr.bf16.mxu0 0
      %563 = vmatpush1.bf16.msra.mxu0 0
      %564 = vmatprep.subr.bf16.mxu0 0
      %565 = vmatpush1.bf16.msra.mxu0 0
      %566 = vmatprep.subr.bf16.mxu0 0
      %567 = vmatpush1.bf16.msra.mxu0 0
      %568 = vmatprep.subr.bf16.mxu0 0
      %569 = vmatpush1.bf16.msra.mxu0 0
      %570 = vmatprep.subr.bf16.mxu0 0
      %571 = vmatpush1.bf16.msra.mxu0 0
      %572 = vmatprep.subr.bf16.mxu0 0
      %573 = vmatpush1.bf16.msra.mxu0 %v543
      %574 = vmatprep.subr.bf16.mxu0 0
      %575 = vmatpush2.bf16.msra.mxu0 0
      %576 = vmatprep.subr.bf16.mxu0 0
      %577 = vmatpush2.bf16.msra.mxu0 0
      %578 = vmatprep.subr.bf16.mxu0 0
      %579 = vmatpush2.bf16.msra.mxu0 0
      %580 = vmatprep.subr.bf16.mxu0 0
      %581 = vmatpush2.bf16.msra.mxu0 0
      %582 = vmatprep.subr.bf16.mxu0 0
      %583 = vmatpush2.bf16.msra.mxu0 0
      %584 = vmatprep.subr.bf16.mxu0 0
      %585 = vmatpush2.bf16.msra.mxu0 0
      %586 = vmatprep.subr.bf16.mxu0 0
      %587 = vmatpush2.bf16.msra.mxu0 0
      %588 = vmatprep.subr.bf16.mxu0 0
      %589 = vmatpush2.bf16.msra.mxu0 0
      %590 = vmatprep.mubr.bf16.mxu0 0
      %591 = vmatmul.mubr.bf16.gmra.mxu0 %v547
      %v592 = vpop.f32.mrf.mxu0
      %v593 = vadd.f32 %v517, %v592
      %v594 = vpop.f32.mrf.mxu0
      %v595 = vpop.f32.mrf.mxu0
      %v596 = vadd.f32 %v517, %v595
      %v597 = vpop.f32.mrf.mxu0
      %598 = vmatprep.mubr.bf16.mxu0 0
      %599 = vmatmul.mubr.bf16.gmra.mxu0 %v550
      %v600 = vpop.f32.mrf.mxu0
      %v601 = vadd.f32 %v517, %v600
      %v602 = vpop.f32.mrf.mxu0
      %v603 = vpop.f32.mrf.mxu0
      %v604 = vadd.f32 %v517, %v603
      %v605 = vpop.f32.mrf.mxu0
      %606 = vmatprep.mubr.bf16.mxu0 0
      %607 = vmatmul.mubr.bf16.gmra.mxu0 %v553
      %v608 = vpop.f32.mrf.mxu0
      %v609 = vadd.f32 %v517, %v608
      %v610 = vpop.f32.mrf.mxu0
      %v611 = vpop.f32.mrf.mxu0
      %v612 = vadd.f32 %v517, %v611
      %v613 = vpop.f32.mrf.mxu0
      %614 = vmatprep.mubr.bf16.mxu0 0
      %615 = vmatmul.mubr.bf16.gmra.mxu0 %v556
      %v616 = vpop.f32.mrf.mxu0
      %v617 = vadd.f32 %v517, %v616
      %v618 = vpop.f32.mrf.mxu0
      %v619 = vpop.f32.mrf.mxu0
      %v620 = vadd.f32 %v517, %v619
      %v621 = vpop.f32.mrf.mxu0
      %622 = vdwg.mxu0
      %v623 = vmax.f32 %v593, 0.0
      %v624 = vmax.f32 %v596, 0.0
      %v625 = vmax.f32 %v601, 0.0
      %v626 = vmax.f32 %v604, 0.0
      %v627 = vmax.f32 %v609, 0.0
      %v628 = vmax.f32 %v612, 0.0
      %v629 = vmax.f32 %v617, 0.0
      %v630 = vmax.f32 %v620, 0.0
      %v631 = vpack.c.bf16 %v624, %v623
      %v632 = vpack.c.bf16 %v626, %v625
      %v633 = vpack.c.bf16 %v628, %v627
      %v634 = vpack.c.bf16 %v630, %v629
      %v635 = vld [vmem:[%s4] sm:$0xf]
      %v636 = vld [vmem:[%s4 + $0x4] sm:$0xf]
      %v637 = vld [vmem:[%s4 + $0x8] sm:$0xf]
      %v638 = vld [vmem:[%s4 + $0xc] sm:$0xf]
      %v639 = vld [vmem:[%s4 + $0x10] sm:$0xf]
      %v640 = vld [vmem:[%s4 + $0x14] sm:$0xf]
      %v641 = vld [vmem:[%s4 + $0x18] sm:$0xf]
      %v642 = vld [vmem:[%s4 + $0x1c] sm:$0xf]
      %v643 = vld [vmem:[%s5] sm:$0x1]
      %v645 = vlaneseq
      %v646 = vshrl.u32 %v645, 7
      %v647 = vsub.s32 0, %v646
      %v648 = vrot.slane %v643, %v647
      %v658 = vunpack.c.l.b16 %v635
      %v659 = vunpack.c.l.b16 %v636
      %v660 = vunpack.c.l.b16 %v637
      %v661 = vunpack.c.l.b16 %v638
      %v662 = vunpack.c.l.b16 %v639
      %v663 = vunpack.c.l.b16 %v640
      %v664 = vunpack.c.l.b16 %v641
      %v665 = vunpack.c.l.b16 %v642
      %v666 = vpack.c.b16 %v659, %v658
      %v667 = vpack.c.b16 %v661, %v660
      %v668 = vpack.c.b16 %v663, %v662
      %v669 = vpack.c.b16 %v665, %v664
      %vm674 = vcmask 523264
      %v676 = vsel %vm674, %v631, 0
      %v679 = vsel %vm674, %v632, 0
      %v682 = vsel %vm674, %v633, 0
      %v685 = vsel %vm674, %v634, 0
      %687 = vmatprep.subr.bf16.mxu0 0
      %688 = vmatpush1.bf16.msra.mxu0 0
      %689 = vmatprep.subr.bf16.mxu0 0
      %690 = vmatpush1.bf16.msra.mxu0 0
      %691 = vmatprep.subr.bf16.mxu0 0
      %692 = vmatpush1.bf16.msra.mxu0 0
      %693 = vmatprep.subr.bf16.mxu0 0
      %694 = vmatpush1.bf16.msra.mxu0 0
      %695 = vmatprep.subr.bf16.mxu0 0
      %696 = vmatpush1.bf16.msra.mxu0 %v669
      %697 = vmatprep.subr.bf16.mxu0 0
      %698 = vmatpush1.bf16.msra.mxu0 %v668
      %699 = vmatprep.subr.bf16.mxu0 0
      %700 = vmatpush1.bf16.msra.mxu0 %v667
      %701 = vmatprep.subr.bf16.mxu0 0
      %702 = vmatpush1.bf16.msra.mxu0 %v666
      %703 = vmatprep.subr.bf16.mxu0 0
      %704 = vmatpush2.bf16.msra.mxu0 0
      %705 = vmatprep.subr.bf16.mxu0 0
      %706 = vmatpush2.bf16.msra.mxu0 0
      %707 = vmatprep.subr.bf16.mxu0 0
      %708 = vmatpush2.bf16.msra.mxu0 0
      %709 = vmatprep.subr.bf16.mxu0 0
      %710 = vmatpush2.bf16.msra.mxu0 0
      %711 = vmatprep.subr.bf16.mxu0 0
      %712 = vmatpush2.bf16.msra.mxu0 0
      %713 = vmatprep.subr.bf16.mxu0 0
      %714 = vmatpush2.bf16.msra.mxu0 0
      %715 = vmatprep.subr.bf16.mxu0 0
      %716 = vmatpush2.bf16.msra.mxu0 0
      %717 = vmatprep.subr.bf16.mxu0 0
      %718 = vmatpush2.bf16.msra.mxu0 0
      %719 = vmatprep.mubr.bf16.mxu0 0
      %720 = vmatmul.mubr.bf16.gmra.mxu0 %v676
      %v721 = vpop.f32.mrf.mxu0
      %v722 = vadd.f32 %v648, %v721
      %v723 = vpop.f32.mrf.mxu0
      %v724 = vpop.f32.mrf.mxu0
      %v725 = vadd.f32 %v648, %v724
      %v726 = vpop.f32.mrf.mxu0
      %727 = vmatprep.mubr.bf16.mxu0 0
      %728 = vmatmul.mubr.bf16.gmra.mxu0 %v679
      %v729 = vpop.f32.mrf.mxu0
      %v730 = vadd.f32 %v648, %v729
      %v731 = vpop.f32.mrf.mxu0
      %v732 = vpop.f32.mrf.mxu0
      %v733 = vadd.f32 %v648, %v732
      %v734 = vpop.f32.mrf.mxu0
      %735 = vmatprep.mubr.bf16.mxu0 0
      %736 = vmatmul.mubr.bf16.gmra.mxu0 %v682
      %v737 = vpop.f32.mrf.mxu0
      %v738 = vadd.f32 %v648, %v737
      %v739 = vpop.f32.mrf.mxu0
      %v740 = vpop.f32.mrf.mxu0
      %v741 = vadd.f32 %v648, %v740
      %v742 = vpop.f32.mrf.mxu0
      %743 = vmatprep.mubr.bf16.mxu0 0
      %744 = vmatmul.mubr.bf16.gmra.mxu0 %v685
      %v745 = vpop.f32.mrf.mxu0
      %v746 = vadd.f32 %v648, %v745
      %v747 = vpop.f32.mrf.mxu0
      %v748 = vpop.f32.mrf.mxu0
      %v749 = vadd.f32 %v648, %v748
      %v750 = vpop.f32.mrf.mxu0
      %751 = vdwg.mxu0
      %v752 = vmax.f32 %v722, 0.0
      %v753 = vmax.f32 %v725, 0.0
      %v754 = vmax.f32 %v730, 0.0
      %v755 = vmax.f32 %v733, 0.0
      %v756 = vmax.f32 %v738, 0.0
      %v757 = vmax.f32 %v741, 0.0
      %v758 = vmax.f32 %v746, 0.0
      %v759 = vmax.f32 %v749, 0.0
      %v760 = vpack.c.bf16 %v753, %v752
      %v761 = vpack.c.bf16 %v755, %v754
      %v762 = vpack.c.bf16 %v757, %v756
      %v763 = vpack.c.bf16 %v759, %v758
      %v764 = vld [vmem:[%s6] sm:$0xf]
      %v765 = vld [vmem:[%s6 + $0x4] sm:$0xf]
      %v766 = vld [vmem:[%s6 + $0x8] sm:$0xf]
      %v767 = vld [vmem:[%s6 + $0xc] sm:$0xf]
      %v768 = vld [vmem:[%s6 + $0x10] sm:$0xf]
      %v769 = vld [vmem:[%s6 + $0x14] sm:$0xf]
      %v770 = vld [vmem:[%s6 + $0x18] sm:$0xf]
      %v771 = vld [vmem:[%s6 + $0x1c] sm:$0xf]
      %v772 = vld [vmem:[%s7] sm:$0x1]
      %v774 = vlaneseq
      %v775 = vshrl.u32 %v774, 7
      %v776 = vsub.s32 0, %v775
      %v777 = vrot.slane %v772, %v776
      %v787 = vunpack.c.l.b16 %v764
      %v788 = vunpack.c.l.b16 %v765
      %v789 = vunpack.c.l.b16 %v766
      %v790 = vunpack.c.l.b16 %v767
      %v791 = vunpack.c.l.b16 %v768
      %v792 = vunpack.c.l.b16 %v769
      %v793 = vunpack.c.l.b16 %v770
      %v794 = vunpack.c.l.b16 %v771
      %v795 = vpack.c.b16 %v788, %v787
      %v796 = vpack.c.b16 %v790, %v789
      %v797 = vpack.c.b16 %v792, %v791
      %v798 = vpack.c.b16 %v794, %v793
      %v804 = vsel %vm674, %v760, 0
      %v807 = vsel %vm674, %v761, 0
      %v810 = vsel %vm674, %v762, 0
      %v813 = vsel %vm674, %v763, 0
      %815 = vmatprep.subr.bf16.mxu0 0
      %816 = vmatpush1.bf16.msra.mxu0 0
      %817 = vmatprep.subr.bf16.mxu0 0
      %818 = vmatpush1.bf16.msra.mxu0 0
      %819 = vmatprep.subr.bf16.mxu0 0
      %820 = vmatpush1.bf16.msra.mxu0 0
      %821 = vmatprep.subr.bf16.mxu0 0
      %822 = vmatpush1.bf16.msra.mxu0 0
      %823 = vmatprep.subr.bf16.mxu0 0
      %824 = vmatpush1.bf16.msra.mxu0 %v798
      %825 = vmatprep.subr.bf16.mxu0 0
      %826 = vmatpush1.bf16.msra.mxu0 %v797
      %827 = vmatprep.subr.bf16.mxu0 0
      %828 = vmatpush1.bf16.msra.mxu0 %v796
      %829 = vmatprep.subr.bf16.mxu0 0
      %830 = vmatpush1.bf16.msra.mxu0 %v795
      %831 = vmatprep.subr.bf16.mxu0 0
      %832 = vmatpush2.bf16.msra.mxu0 0
      %833 = vmatprep.subr.bf16.mxu0 0
      %834 = vmatpush2.bf16.msra.mxu0 0
      %835 = vmatprep.subr.bf16.mxu0 0
      %836 = vmatpush2.bf16.msra.mxu0 0
      %837 = vmatprep.subr.bf16.mxu0 0
      %838 = vmatpush2.bf16.msra.mxu0 0
      %839 = vmatprep.subr.bf16.mxu0 0
      %840 = vmatpush2.bf16.msra.mxu0 0
      %841 = vmatprep.subr.bf16.mxu0 0
      %842 = vmatpush2.bf16.msra.mxu0 0
      %843 = vmatprep.subr.bf16.mxu0 0
      %844 = vmatpush2.bf16.msra.mxu0 0
      %845 = vmatprep.subr.bf16.mxu0 0
      %846 = vmatpush2.bf16.msra.mxu0 0
      %847 = vmatprep.mubr.bf16.mxu0 0
      %848 = vmatmul.mubr.bf16.gmra.mxu0 %v804
      %v849 = vpop.f32.mrf.mxu0
      %v850 = vadd.f32 %v777, %v849
      %v851 = vpop.f32.mrf.mxu0
      %v852 = vpop.f32.mrf.mxu0
      %v853 = vadd.f32 %v777, %v852
      %v854 = vpop.f32.mrf.mxu0
      %855 = vmatprep.mubr.bf16.mxu0 0
      %856 = vmatmul.mubr.bf16.gmra.mxu0 %v807
      %v857 = vpop.f32.mrf.mxu0
      %v858 = vadd.f32 %v777, %v857
      %v859 = vpop.f32.mrf.mxu0
      %v860 = vpop.f32.mrf.mxu0
      %v861 = vadd.f32 %v777, %v860
      %v862 = vpop.f32.mrf.mxu0
      %863 = vmatprep.mubr.bf16.mxu0 0
      %864 = vmatmul.mubr.bf16.gmra.mxu0 %v810
      %v865 = vpop.f32.mrf.mxu0
      %v866 = vadd.f32 %v777, %v865
      %v867 = vpop.f32.mrf.mxu0
      %v868 = vpop.f32.mrf.mxu0
      %v869 = vadd.f32 %v777, %v868
      %v870 = vpop.f32.mrf.mxu0
      %871 = vmatprep.mubr.bf16.mxu0 0
      %872 = vmatmul.mubr.bf16.gmra.mxu0 %v813
      %v873 = vpop.f32.mrf.mxu0
      %v874 = vadd.f32 %v777, %v873
      %v875 = vpop.f32.mrf.mxu0
      %v876 = vpop.f32.mrf.mxu0
      %v877 = vadd.f32 %v777, %v876
      %v878 = vpop.f32.mrf.mxu0
      %879 = vdwg.mxu0
      %v880 = vmax.f32 %v850, 0.0
      %v881 = vmax.f32 %v853, 0.0
      %v882 = vmax.f32 %v858, 0.0
      %v883 = vmax.f32 %v861, 0.0
      %v884 = vmax.f32 %v866, 0.0
      %v885 = vmax.f32 %v869, 0.0
      %v886 = vmax.f32 %v874, 0.0
      %v887 = vmax.f32 %v877, 0.0
      %v888 = vpack.c.bf16 %v881, %v880
      %v889 = vpack.c.bf16 %v883, %v882
      %v890 = vpack.c.bf16 %v885, %v884
      %v891 = vpack.c.bf16 %v887, %v886
      %v892 = vld [vmem:[%s8] sm:$0xf]
      %v893 = vld [vmem:[%s8 + $0x4] sm:$0xf]
      %v894 = vld [vmem:[%s8 + $0x8] sm:$0xf]
      %v895 = vld [vmem:[%s8 + $0xc] sm:$0xf]
      %v896 = vld [vmem:[%s8 + $0x10] sm:$0xf]
      %v897 = vld [vmem:[%s8 + $0x14] sm:$0xf]
      %v898 = vld [vmem:[%s8 + $0x18] sm:$0xf]
      %v899 = vld [vmem:[%s8 + $0x1c] sm:$0xf]
      %v900 = vld [vmem:[%s9] sm:$0x1]
      %v902 = vlaneseq
      %v903 = vshrl.u32 %v902, 7
      %v904 = vsub.s32 0, %v903
      %v905 = vrot.slane %v900, %v904
      %v915 = vunpack.c.l.b16 %v892
      %v916 = vunpack.c.l.b16 %v893
      %v917 = vunpack.c.l.b16 %v894
      %v918 = vunpack.c.l.b16 %v895
      %v919 = vunpack.c.l.b16 %v896
      %v920 = vunpack.c.l.b16 %v897
      %v921 = vunpack.c.l.b16 %v898
      %v922 = vunpack.c.l.b16 %v899
      %v923 = vpack.c.b16 %v916, %v915
      %v924 = vpack.c.b16 %v918, %v917
      %v925 = vpack.c.b16 %v920, %v919
      %v926 = vpack.c.b16 %v922, %v921
      %v932 = vsel %vm674, %v888, 0
      %v935 = vsel %vm674, %v889, 0
      %v938 = vsel %vm674, %v890, 0
      %v941 = vsel %vm674, %v891, 0
      %943 = vmatprep.subr.bf16.mxu0 0
      %944 = vmatpush1.bf16.msra.mxu0 0
      %945 = vmatprep.subr.bf16.mxu0 0
      %946 = vmatpush1.bf16.msra.mxu0 0
      %947 = vmatprep.subr.bf16.mxu0 0
      %948 = vmatpush1.bf16.msra.mxu0 0
      %949 = vmatprep.subr.bf16.mxu0 0
      %950 = vmatpush1.bf16.msra.mxu0 0
      %951 = vmatprep.subr.bf16.mxu0 0
      %952 = vmatpush1.bf16.msra.mxu0 %v926
      %953 = vmatprep.subr.bf16.mxu0 0
      %954 = vmatpush1.bf16.msra.mxu0 %v925
      %955 = vmatprep.subr.bf16.mxu0 0
      %956 = vmatpush1.bf16.msra.mxu0 %v924
      %957 = vmatprep.subr.bf16.mxu0 0
      %958 = vmatpush1.bf16.msra.mxu0 %v923
      %959 = vmatprep.subr.bf16.mxu0 0
      %960 = vmatpush2.bf16.msra.mxu0 0
      %961 = vmatprep.subr.bf16.mxu0 0
      %962 = vmatpush2.bf16.msra.mxu0 0
      %963 = vmatprep.subr.bf16.mxu0 0
      %964 = vmatpush2.bf16.msra.mxu0 0
      %965 = vmatprep.subr.bf16.mxu0 0
      %966 = vmatpush2.bf16.msra.mxu0 0
      %967 = vmatprep.subr.bf16.mxu0 0
      %968 = vmatpush2.bf16.msra.mxu0 0
      %969 = vmatprep.subr.bf16.mxu0 0
      %970 = vmatpush2.bf16.msra.mxu0 0
      %971 = vmatprep.subr.bf16.mxu0 0
      %972 = vmatpush2.bf16.msra.mxu0 0
      %973 = vmatprep.subr.bf16.mxu0 0
      %974 = vmatpush2.bf16.msra.mxu0 0
      %975 = vmatprep.mubr.bf16.mxu0 0
      %976 = vmatmul.mubr.bf16.gmra.mxu0 %v932
      %v977 = vpop.f32.mrf.mxu0
      %v978 = vadd.f32 %v905, %v977
      %v979 = vpop.f32.mrf.mxu0
      %v980 = vpop.f32.mrf.mxu0
      %v981 = vadd.f32 %v905, %v980
      %v982 = vpop.f32.mrf.mxu0
      %983 = vmatprep.mubr.bf16.mxu0 0
      %984 = vmatmul.mubr.bf16.gmra.mxu0 %v935
      %v985 = vpop.f32.mrf.mxu0
      %v986 = vadd.f32 %v905, %v985
      %v987 = vpop.f32.mrf.mxu0
      %v988 = vpop.f32.mrf.mxu0
      %v989 = vadd.f32 %v905, %v988
      %v990 = vpop.f32.mrf.mxu0
      %991 = vmatprep.mubr.bf16.mxu0 0
      %992 = vmatmul.mubr.bf16.gmra.mxu0 %v938
      %v993 = vpop.f32.mrf.mxu0
      %v994 = vadd.f32 %v905, %v993
      %v995 = vpop.f32.mrf.mxu0
      %v996 = vpop.f32.mrf.mxu0
      %v997 = vadd.f32 %v905, %v996
      %v998 = vpop.f32.mrf.mxu0
      %999 = vmatprep.mubr.bf16.mxu0 0
      %1000 = vmatmul.mubr.bf16.gmra.mxu0 %v941
      %v1001 = vpop.f32.mrf.mxu0
      %v1002 = vadd.f32 %v905, %v1001
      %v1003 = vpop.f32.mrf.mxu0
      %v1004 = vpop.f32.mrf.mxu0
      %v1005 = vadd.f32 %v905, %v1004
      %v1006 = vpop.f32.mrf.mxu0
      %1007 = vdwg.mxu0
      %v1008 = vld [vmem:[%s10] sm:$0xf]
      %v1009 = vld [vmem:[%s10 + $0x4] sm:$0xf]
      %v1010 = vld [vmem:[%s11] sm:$0x1]
      %v1012 = vlaneseq
      %v1013 = vshrl.u32 %v1012, 7
      %v1014 = vsub.s32 0, %v1013
      %v1015 = vrot.slane %v1010, %v1014
      %v1019 = vunpack.c.l.b16 %v1008
      %v1020 = vunpack.c.l.b16 %v1009
      %v1021 = vpack.c.b16 %v1020, %v1019
      %1023 = vmatprep.subr.bf16.mxu0 0
      %1024 = vmatpush1.bf16.msra.mxu0 0
      %1025 = vmatprep.subr.bf16.mxu0 0
      %1026 = vmatpush1.bf16.msra.mxu0 0
      %1027 = vmatprep.subr.bf16.mxu0 0
      %1028 = vmatpush1.bf16.msra.mxu0 0
      %1029 = vmatprep.subr.bf16.mxu0 0
      %1030 = vmatpush1.bf16.msra.mxu0 0
      %1031 = vmatprep.subr.bf16.mxu0 0
      %1032 = vmatpush1.bf16.msra.mxu0 0
      %1033 = vmatprep.subr.bf16.mxu0 0
      %1034 = vmatpush1.bf16.msra.mxu0 0
      %1035 = vmatprep.subr.bf16.mxu0 0
      %1036 = vmatpush1.bf16.msra.mxu0 0
      %1037 = vmatprep.subr.bf16.mxu0 0
      %1038 = vmatpush1.bf16.msra.mxu0 %v1021
      %1039 = vmatprep.subr.bf16.mxu0 0
      %1040 = vmatpush2.bf16.msra.mxu0 0
      %1041 = vmatprep.subr.bf16.mxu0 0
      %1042 = vmatpush2.bf16.msra.mxu0 0
      %1043 = vmatprep.subr.bf16.mxu0 0
      %1044 = vmatpush2.bf16.msra.mxu0 0
      %1045 = vmatprep.subr.bf16.mxu0 0
      %1046 = vmatpush2.bf16.msra.mxu0 0
      %1047 = vmatprep.subr.bf16.mxu0 0
      %1048 = vmatpush2.bf16.msra.mxu0 0
      %1049 = vmatprep.subr.bf16.mxu0 0
      %1050 = vmatpush2.bf16.msra.mxu0 0
      %1051 = vmatprep.subr.bf16.mxu0 0
      %1052 = vmatpush2.bf16.msra.mxu0 0
      %1053 = vmatprep.subr.bf16.mxu0 0
      %1054 = vmatpush2.bf16.msra.mxu0 0
      %1055 = vmatprep.mubr.bf16.mxu0 0
      %1056 = vmatmul.mubr.bf16.gmra.mxu0 %v547
      %v1057 = vpop.f32.mrf.mxu0
      %v1058 = vadd.f32 %v1015, %v1057
      %v1059 = vpop.f32.mrf.mxu0
      %v1060 = vpop.f32.mrf.mxu0
      %v1061 = vadd.f32 %v1015, %v1060
      %v1062 = vpop.f32.mrf.mxu0
      %1063 = vmatprep.mubr.bf16.mxu0 0
      %1064 = vmatmul.mubr.bf16.gmra.mxu0 %v550
      %v1065 = vpop.f32.mrf.mxu0
      %v1066 = vadd.f32 %v1015, %v1065
      %v1067 = vpop.f32.mrf.mxu0
      %v1068 = vpop.f32.mrf.mxu0
      %v1069 = vadd.f32 %v1015, %v1068
      %v1070 = vpop.f32.mrf.mxu0
      %1071 = vmatprep.mubr.bf16.mxu0 0
      %1072 = vmatmul.mubr.bf16.gmra.mxu0 %v553
      %v1073 = vpop.f32.mrf.mxu0
      %v1074 = vadd.f32 %v1015, %v1073
      %v1075 = vpop.f32.mrf.mxu0
      %v1076 = vpop.f32.mrf.mxu0
      %v1077 = vadd.f32 %v1015, %v1076
      %v1078 = vpop.f32.mrf.mxu0
      %1079 = vmatprep.mubr.bf16.mxu0 0
      %1080 = vmatmul.mubr.bf16.gmra.mxu0 %v556
      %v1081 = vpop.f32.mrf.mxu0
      %v1082 = vadd.f32 %v1015, %v1081
      %v1083 = vpop.f32.mrf.mxu0
      %v1084 = vpop.f32.mrf.mxu0
      %v1085 = vadd.f32 %v1015, %v1084
      %v1086 = vpop.f32.mrf.mxu0
      %1087 = vdwg.mxu0
      %v1088 = vmax.f32 %v1058, 0.0
      %v1089 = vmax.f32 %v1061, 0.0
      %v1090 = vmax.f32 %v1066, 0.0
      %v1091 = vmax.f32 %v1069, 0.0
      %v1092 = vmax.f32 %v1074, 0.0
      %v1093 = vmax.f32 %v1077, 0.0
      %v1094 = vmax.f32 %v1082, 0.0
      %v1095 = vmax.f32 %v1085, 0.0
      %v1096 = vpack.c.bf16 %v1089, %v1088
      %v1097 = vpack.c.bf16 %v1091, %v1090
      %v1098 = vpack.c.bf16 %v1093, %v1092
      %v1099 = vpack.c.bf16 %v1095, %v1094
      %v1100 = vld [vmem:[%s12] sm:$0xf]
      %v1101 = vld [vmem:[%s12 + $0x4] sm:$0xf]
      %v1102 = vld [vmem:[%s12 + $0x8] sm:$0xf]
      %v1103 = vld [vmem:[%s12 + $0xc] sm:$0xf]
      %v1104 = vld [vmem:[%s12 + $0x10] sm:$0xf]
      %v1105 = vld [vmem:[%s12 + $0x14] sm:$0xf]
      %v1106 = vld [vmem:[%s12 + $0x18] sm:$0xf]
      %v1107 = vld [vmem:[%s12 + $0x1c] sm:$0xf]
      %v1108 = vld [vmem:[%s13] sm:$0x1]
      %v1110 = vlaneseq
      %v1111 = vshrl.u32 %v1110, 7
      %v1112 = vsub.s32 0, %v1111
      %v1113 = vrot.slane %v1108, %v1112
      %v1123 = vunpack.c.l.b16 %v1100
      %v1124 = vunpack.c.l.b16 %v1101
      %v1125 = vunpack.c.l.b16 %v1102
      %v1126 = vunpack.c.l.b16 %v1103
      %v1127 = vunpack.c.l.b16 %v1104
      %v1128 = vunpack.c.l.b16 %v1105
      %v1129 = vunpack.c.l.b16 %v1106
      %v1130 = vunpack.c.l.b16 %v1107
      %v1131 = vpack.c.b16 %v1124, %v1123
      %v1132 = vpack.c.b16 %v1126, %v1125
      %v1133 = vpack.c.b16 %v1128, %v1127
      %v1134 = vpack.c.b16 %v1130, %v1129
      %v1140 = vsel %vm674, %v1096, 0
      %v1143 = vsel %vm674, %v1097, 0
      %v1146 = vsel %vm674, %v1098, 0
      %v1149 = vsel %vm674, %v1099, 0
      %1151 = vmatprep.subr.bf16.mxu0 0
      %1152 = vmatpush1.bf16.msra.mxu0 0
      %1153 = vmatprep.subr.bf16.mxu0 0
      %1154 = vmatpush1.bf16.msra.mxu0 0
      %1155 = vmatprep.subr.bf16.mxu0 0
      %1156 = vmatpush1.bf16.msra.mxu0 0
      %1157 = vmatprep.subr.bf16.mxu0 0
      %1158 = vmatpush1.bf16.msra.mxu0 0
      %1159 = vmatprep.subr.bf16.mxu0 0
      %1160 = vmatpush1.bf16.msra.mxu0 %v1134
      %1161 = vmatprep.subr.bf16.mxu0 0
      %1162 = vmatpush1.bf16.msra.mxu0 %v1133
      %1163 = vmatprep.subr.bf16.mxu0 0
      %1164 = vmatpush1.bf16.msra.mxu0 %v1132
      %1165 = vmatprep.subr.bf16.mxu0 0
      %1166 = vmatpush1.bf16.msra.mxu0 %v1131
      %1167 = vmatprep.subr.bf16.mxu0 0
      %1168 = vmatpush2.bf16.msra.mxu0 0
      %1169 = vmatprep.subr.bf16.mxu0 0
      %1170 = vmatpush2.bf16.msra.mxu0 0
      %1171 = vmatprep.subr.bf16.mxu0 0
      %1172 = vmatpush2.bf16.msra.mxu0 0
      %1173 = vmatprep.subr.bf16.mxu0 0
      %1174 = vmatpush2.bf16.msra.mxu0 0
      %1175 = vmatprep.subr.bf16.mxu0 0
      %1176 = vmatpush2.bf16.msra.mxu0 0
      %1177 = vmatprep.subr.bf16.mxu0 0
      %1178 = vmatpush2.bf16.msra.mxu0 0
      %1179 = vmatprep.subr.bf16.mxu0 0
      %1180 = vmatpush2.bf16.msra.mxu0 0
      %1181 = vmatprep.subr.bf16.mxu0 0
      %1182 = vmatpush2.bf16.msra.mxu0 0
      %1183 = vmatprep.mubr.bf16.mxu0 0
      %1184 = vmatmul.mubr.bf16.gmra.mxu0 %v1140
      %v1185 = vpop.f32.mrf.mxu0
      %v1186 = vadd.f32 %v1113, %v1185
      %v1187 = vpop.f32.mrf.mxu0
      %v1188 = vpop.f32.mrf.mxu0
      %v1189 = vadd.f32 %v1113, %v1188
      %v1190 = vpop.f32.mrf.mxu0
      %1191 = vmatprep.mubr.bf16.mxu0 0
      %1192 = vmatmul.mubr.bf16.gmra.mxu0 %v1143
      %v1193 = vpop.f32.mrf.mxu0
      %v1194 = vadd.f32 %v1113, %v1193
      %v1195 = vpop.f32.mrf.mxu0
      %v1196 = vpop.f32.mrf.mxu0
      %v1197 = vadd.f32 %v1113, %v1196
      %v1198 = vpop.f32.mrf.mxu0
      %1199 = vmatprep.mubr.bf16.mxu0 0
      %1200 = vmatmul.mubr.bf16.gmra.mxu0 %v1146
      %v1201 = vpop.f32.mrf.mxu0
      %v1202 = vadd.f32 %v1113, %v1201
      %v1203 = vpop.f32.mrf.mxu0
      %v1204 = vpop.f32.mrf.mxu0
      %v1205 = vadd.f32 %v1113, %v1204
      %v1206 = vpop.f32.mrf.mxu0
      %1207 = vmatprep.mubr.bf16.mxu0 0
      %1208 = vmatmul.mubr.bf16.gmra.mxu0 %v1149
      %v1209 = vpop.f32.mrf.mxu0
      %v1210 = vadd.f32 %v1113, %v1209
      %v1211 = vpop.f32.mrf.mxu0
      %v1212 = vpop.f32.mrf.mxu0
      %v1213 = vadd.f32 %v1113, %v1212
      %v1214 = vpop.f32.mrf.mxu0
      %1215 = vdwg.mxu0
      %v1216 = vxor.u32 %v1186, 2147483648
      %v1217 = vxor.u32 %v1189, 2147483648
      %v1218 = vxor.u32 %v1194, 2147483648
      %v1219 = vxor.u32 %v1197, 2147483648
      %v1220 = vxor.u32 %v1202, 2147483648
      %v1221 = vxor.u32 %v1205, 2147483648
      %v1222 = vxor.u32 %v1210, 2147483648
      %v1223 = vxor.u32 %v1213, 2147483648
      %v1224 = vmul.f32 %v1216, 1.442695
      %v1225 = vpow.pop %v1224
      %v1226 = vmul.f32 %v1217, 1.442695
      %v1227 = vpow.pop %v1226
      %v1228 = vmul.f32 %v1218, 1.442695
      %v1229 = vpow.pop %v1228
      %v1230 = vmul.f32 %v1219, 1.442695
      %v1231 = vpow.pop %v1230
      %v1232 = vmul.f32 %v1220, 1.442695
      %v1233 = vpow.pop %v1232
      %v1234 = vmul.f32 %v1221, 1.442695
      %v1235 = vpow.pop %v1234
      %v1236 = vmul.f32 %v1222, 1.442695
      %v1237 = vpow.pop %v1236
      %v1238 = vmul.f32 %v1223, 1.442695
      %v1239 = vpow.pop %v1238
      %v1240 = vadd.f32 %v1225, 1.0
      %v1241 = vadd.f32 %v1227, 1.0
      %v1242 = vadd.f32 %v1229, 1.0
      %v1243 = vadd.f32 %v1231, 1.0
      %v1244 = vadd.f32 %v1233, 1.0
      %v1245 = vadd.f32 %v1235, 1.0
      %v1246 = vadd.f32 %v1237, 1.0
      %v1247 = vadd.f32 %v1239, 1.0
      %v1248 = vrcp.pop %v1240
      %v1249 = vmul.f32 1.0, %v1248
      %v1250 = vrcp.pop %v1241
      %v1251 = vmul.f32 1.0, %v1250
      %v1252 = vrcp.pop %v1242
      %v1253 = vmul.f32 1.0, %v1252
      %v1254 = vrcp.pop %v1243
      %v1255 = vmul.f32 1.0, %v1254
      %v1256 = vrcp.pop %v1244
      %v1257 = vmul.f32 1.0, %v1256
      %v1258 = vrcp.pop %v1245
      %v1259 = vmul.f32 1.0, %v1258
      %v1260 = vrcp.pop %v1246
      %v1261 = vmul.f32 1.0, %v1260
      %v1262 = vrcp.pop %v1247
      %v1263 = vmul.f32 1.0, %v1262
      %v1264 = vmul.f32 %v1249, 2.0
      %v1265 = vmul.f32 %v1251, 2.0
      %v1266 = vmul.f32 %v1253, 2.0
      %v1267 = vmul.f32 %v1255, 2.0
      %v1268 = vmul.f32 %v1257, 2.0
      %v1269 = vmul.f32 %v1259, 2.0
      %v1270 = vmul.f32 %v1261, 2.0
      %v1271 = vmul.f32 %v1263, 2.0
      %1273 = vset.pattern.permute.xlu0 0
      %1274 = vperm.xlu0 %1273, %v502
      %v1275 = vpop.permute.xlu0 %1274
      %1278 = vset.pattern.permute.xlu0 0
      %1279 = vperm.xlu0 %1278, %v503
      %v1280 = vpop.permute.xlu0 %1279
      %1283 = vset.pattern.permute.xlu0 0
      %1284 = vperm.xlu0 %1283, %v504
      %v1285 = vpop.permute.xlu0 %1284
      %1288 = vset.pattern.permute.xlu0 0
      %1289 = vperm.xlu0 %1288, %v505
      %v1290 = vpop.permute.xlu0 %1289
      %1293 = vset.pattern.permute.xlu0 0
      %1294 = vperm.xlu0 %1293, %v506
      %v1295 = vpop.permute.xlu0 %1294
      %1298 = vset.pattern.permute.xlu0 0
      %1299 = vperm.xlu0 %1298, %v507
      %v1300 = vpop.permute.xlu0 %1299
      %1303 = vset.pattern.permute.xlu0 0
      %1304 = vperm.xlu0 %1303, %v508
      %v1305 = vpop.permute.xlu0 %1304
      %1308 = vset.pattern.permute.xlu0 0
      %1309 = vperm.xlu0 %1308, %v509
      %v1310 = vpop.permute.xlu0 %1309
      %v1312 = vsub.f32 %v1264, %v1275
      %v1313 = vsub.f32 %v1265, %v1280
      %v1314 = vsub.f32 %v1266, %v1285
      %v1315 = vsub.f32 %v1267, %v1290
      %v1316 = vsub.f32 %v1268, %v1295
      %v1317 = vsub.f32 %v1269, %v1300
      %v1318 = vsub.f32 %v1270, %v1305
      %v1319 = vsub.f32 %v1271, %v1310
      %v1320 = vmul.f32 %v1312, %v1312
      %v1321 = vmul.f32 %v1313, %v1313
      %v1322 = vmul.f32 %v1314, %v1314
      %v1323 = vmul.f32 %v1315, %v1315
      %v1324 = vmul.f32 %v1316, %v1316
      %v1325 = vmul.f32 %v1317, %v1317
      %v1326 = vmul.f32 %v1318, %v1318
      %v1327 = vmul.f32 %v1319, %v1319
      %1328 = vset.pattern.permute.xlu0 1
      %1329 = vperm.xlu0 %1328, %v502
      %v1330 = vpop.permute.xlu0 %1329
      %1332 = vset.pattern.permute.xlu0 1
      %1333 = vperm.xlu0 %1332, %v503
      %v1334 = vpop.permute.xlu0 %1333
      %1336 = vset.pattern.permute.xlu0 1
      %1337 = vperm.xlu0 %1336, %v504
      %v1338 = vpop.permute.xlu0 %1337
      %1340 = vset.pattern.permute.xlu0 1
      %1341 = vperm.xlu0 %1340, %v505
      %v1342 = vpop.permute.xlu0 %1341
      %1344 = vset.pattern.permute.xlu0 1
      %1345 = vperm.xlu0 %1344, %v506
      %v1346 = vpop.permute.xlu0 %1345
      %1348 = vset.pattern.permute.xlu0 1
      %1349 = vperm.xlu0 %1348, %v507
      %v1350 = vpop.permute.xlu0 %1349
      %1352 = vset.pattern.permute.xlu0 1
      %1353 = vperm.xlu0 %1352, %v508
      %v1354 = vpop.permute.xlu0 %1353
      %1356 = vset.pattern.permute.xlu0 1
      %1357 = vperm.xlu0 %1356, %v509
      %v1358 = vpop.permute.xlu0 %1357
      %v1360 = vsub.f32 %v1264, %v1330
      %v1361 = vsub.f32 %v1265, %v1334
      %v1362 = vsub.f32 %v1266, %v1338
      %v1363 = vsub.f32 %v1267, %v1342
      %v1364 = vsub.f32 %v1268, %v1346
      %v1365 = vsub.f32 %v1269, %v1350
      %v1366 = vsub.f32 %v1270, %v1354
      %v1367 = vsub.f32 %v1271, %v1358
      %v1368 = vmul.f32 %v1360, %v1360
      %v1369 = vmul.f32 %v1361, %v1361
      %v1370 = vmul.f32 %v1362, %v1362
      %v1371 = vmul.f32 %v1363, %v1363
      %v1372 = vmul.f32 %v1364, %v1364
      %v1373 = vmul.f32 %v1365, %v1365
      %v1374 = vmul.f32 %v1366, %v1366
      %v1375 = vmul.f32 %v1367, %v1367
      %1384 = vrot.lane.b32.xlu0 %v1368, 96
      %v1385 = vpop.permute.xlu0 %1384
      %1386 = vrot.lane.b32.xlu0 %v1369, 96
      %v1387 = vpop.permute.xlu0 %1386
      %1388 = vrot.lane.b32.xlu0 %v1370, 96
      %v1389 = vpop.permute.xlu0 %1388
      %1390 = vrot.lane.b32.xlu0 %v1371, 96
      %v1391 = vpop.permute.xlu0 %1390
      %1392 = vrot.lane.b32.xlu0 %v1372, 96
      %v1393 = vpop.permute.xlu0 %1392
      %1394 = vrot.lane.b32.xlu0 %v1373, 96
      %v1395 = vpop.permute.xlu0 %1394
      %1396 = vrot.lane.b32.xlu0 %v1374, 96
      %v1397 = vpop.permute.xlu0 %1396
      %1398 = vrot.lane.b32.xlu0 %v1375, 96
      %v1399 = vpop.permute.xlu0 %1398
      %v1408 = vadd.f32 %v1320, %v1385
      %v1409 = vadd.f32 %v1321, %v1387
      %v1410 = vadd.f32 %v1322, %v1389
      %v1411 = vadd.f32 %v1323, %v1391
      %v1412 = vadd.f32 %v1324, %v1393
      %v1413 = vadd.f32 %v1325, %v1395
      %v1414 = vadd.f32 %v1326, %v1397
      %v1415 = vadd.f32 %v1327, %v1399
      %1416 = vset.pattern.permute.xlu0 2
      %1417 = vperm.xlu0 %1416, %v502
      %v1418 = vpop.permute.xlu0 %1417
      %1420 = vset.pattern.permute.xlu0 2
      %1421 = vperm.xlu0 %1420, %v503
      %v1422 = vpop.permute.xlu0 %1421
      %1424 = vset.pattern.permute.xlu0 2
      %1425 = vperm.xlu0 %1424, %v504
      %v1426 = vpop.permute.xlu0 %1425
      %1428 = vset.pattern.permute.xlu0 2
      %1429 = vperm.xlu0 %1428, %v505
      %v1430 = vpop.permute.xlu0 %1429
      %1432 = vset.pattern.permute.xlu0 2
      %1433 = vperm.xlu0 %1432, %v506
      %v1434 = vpop.permute.xlu0 %1433
      %1436 = vset.pattern.permute.xlu0 2
      %1437 = vperm.xlu0 %1436, %v507
      %v1438 = vpop.permute.xlu0 %1437
      %1440 = vset.pattern.permute.xlu0 2
      %1441 = vperm.xlu0 %1440, %v508
      %v1442 = vpop.permute.xlu0 %1441
      %1444 = vset.pattern.permute.xlu0 2
      %1445 = vperm.xlu0 %1444, %v509
      %v1446 = vpop.permute.xlu0 %1445
      %v1448 = vsub.f32 %v1264, %v1418
      %v1449 = vsub.f32 %v1265, %v1422
      %v1450 = vsub.f32 %v1266, %v1426
      %v1451 = vsub.f32 %v1267, %v1430
      %v1452 = vsub.f32 %v1268, %v1434
      %v1453 = vsub.f32 %v1269, %v1438
      %v1454 = vsub.f32 %v1270, %v1442
      %v1455 = vsub.f32 %v1271, %v1446
      %v1456 = vmul.f32 %v1448, %v1448
      %v1457 = vmul.f32 %v1449, %v1449
      %v1458 = vmul.f32 %v1450, %v1450
      %v1459 = vmul.f32 %v1451, %v1451
      %v1460 = vmul.f32 %v1452, %v1452
      %v1461 = vmul.f32 %v1453, %v1453
      %v1462 = vmul.f32 %v1454, %v1454
      %v1463 = vmul.f32 %v1455, %v1455
      %1472 = vrot.lane.b32.xlu0 %v1456, 64
      %v1473 = vpop.permute.xlu0 %1472
      %1474 = vrot.lane.b32.xlu0 %v1457, 64
      %v1475 = vpop.permute.xlu0 %1474
      %1476 = vrot.lane.b32.xlu0 %v1458, 64
      %v1477 = vpop.permute.xlu0 %1476
      %1478 = vrot.lane.b32.xlu0 %v1459, 64
      %v1479 = vpop.permute.xlu0 %1478
      %1480 = vrot.lane.b32.xlu0 %v1460, 64
      %v1481 = vpop.permute.xlu0 %1480
      %1482 = vrot.lane.b32.xlu0 %v1461, 64
      %v1483 = vpop.permute.xlu0 %1482
      %1484 = vrot.lane.b32.xlu0 %v1462, 64
      %v1485 = vpop.permute.xlu0 %1484
      %1486 = vrot.lane.b32.xlu0 %v1463, 64
      %v1487 = vpop.permute.xlu0 %1486
      %v1496 = vadd.f32 %v1408, %v1473
      %v1497 = vadd.f32 %v1409, %v1475
      %v1498 = vadd.f32 %v1410, %v1477
      %v1499 = vadd.f32 %v1411, %v1479
      %v1500 = vadd.f32 %v1412, %v1481
      %v1501 = vadd.f32 %v1413, %v1483
      %v1502 = vadd.f32 %v1414, %v1485
      %v1503 = vadd.f32 %v1415, %v1487
      %1504 = vset.pattern.permute.xlu0 3
      %1505 = vperm.xlu0 %1504, %v502
      %v1506 = vpop.permute.xlu0 %1505
      %1508 = vset.pattern.permute.xlu0 3
      %1509 = vperm.xlu0 %1508, %v503
      %v1510 = vpop.permute.xlu0 %1509
      %1512 = vset.pattern.permute.xlu0 3
      %1513 = vperm.xlu0 %1512, %v504
      %v1514 = vpop.permute.xlu0 %1513
      %1516 = vset.pattern.permute.xlu0 3
      %1517 = vperm.xlu0 %1516, %v505
      %v1518 = vpop.permute.xlu0 %1517
      %1520 = vset.pattern.permute.xlu0 3
      %1521 = vperm.xlu0 %1520, %v506
      %v1522 = vpop.permute.xlu0 %1521
      %1524 = vset.pattern.permute.xlu0 3
      %1525 = vperm.xlu0 %1524, %v507
      %v1526 = vpop.permute.xlu0 %1525
      %1528 = vset.pattern.permute.xlu0 3
      %1529 = vperm.xlu0 %1528, %v508
      %v1530 = vpop.permute.xlu0 %1529
      %1532 = vset.pattern.permute.xlu0 3
      %1533 = vperm.xlu0 %1532, %v509
      %v1534 = vpop.permute.xlu0 %1533
      %v1536 = vsub.f32 %v1264, %v1506
      %v1537 = vsub.f32 %v1265, %v1510
      %v1538 = vsub.f32 %v1266, %v1514
      %v1539 = vsub.f32 %v1267, %v1518
      %v1540 = vsub.f32 %v1268, %v1522
      %v1541 = vsub.f32 %v1269, %v1526
      %v1542 = vsub.f32 %v1270, %v1530
      %v1543 = vsub.f32 %v1271, %v1534
      %v1544 = vmul.f32 %v1536, %v1536
      %v1545 = vmul.f32 %v1537, %v1537
      %v1546 = vmul.f32 %v1538, %v1538
      %v1547 = vmul.f32 %v1539, %v1539
      %v1548 = vmul.f32 %v1540, %v1540
      %v1549 = vmul.f32 %v1541, %v1541
      %v1550 = vmul.f32 %v1542, %v1542
      %v1551 = vmul.f32 %v1543, %v1543
      %1560 = vrot.lane.b32.xlu0 %v1544, 32
      %v1561 = vpop.permute.xlu0 %1560
      %1562 = vrot.lane.b32.xlu0 %v1545, 32
      %v1563 = vpop.permute.xlu0 %1562
      %1564 = vrot.lane.b32.xlu0 %v1546, 32
      %v1565 = vpop.permute.xlu0 %1564
      %1566 = vrot.lane.b32.xlu0 %v1547, 32
      %v1567 = vpop.permute.xlu0 %1566
      %1568 = vrot.lane.b32.xlu0 %v1548, 32
      %v1569 = vpop.permute.xlu0 %1568
      %1570 = vrot.lane.b32.xlu0 %v1549, 32
      %v1571 = vpop.permute.xlu0 %1570
      %1572 = vrot.lane.b32.xlu0 %v1550, 32
      %v1573 = vpop.permute.xlu0 %1572
      %1574 = vrot.lane.b32.xlu0 %v1551, 32
      %v1575 = vpop.permute.xlu0 %1574
      %v1584 = vadd.f32 %v1496, %v1561
      %v1585 = vadd.f32 %v1497, %v1563
      %v1586 = vadd.f32 %v1498, %v1565
      %v1587 = vadd.f32 %v1499, %v1567
      %v1588 = vadd.f32 %v1500, %v1569
      %v1589 = vadd.f32 %v1501, %v1571
      %v1590 = vadd.f32 %v1502, %v1573
      %v1591 = vadd.f32 %v1503, %v1575
      %v1592 = vadd.f32 %v1584, 1e-07
      %v1593 = vadd.f32 %v1585, 1e-07
      %v1594 = vadd.f32 %v1586, 1e-07
      %v1595 = vadd.f32 %v1587, 1e-07
      %v1596 = vadd.f32 %v1588, 1e-07
      %v1597 = vadd.f32 %v1589, 1e-07
      %v1598 = vadd.f32 %v1590, 1e-07
      %v1599 = vadd.f32 %v1591, 1e-07
      %v1600 = vrsqrt.pop %v1592
      %v1601 = vmul.f32 %v1592, %v1600
      %vm1602 = vcmp.eq.f32.partialorder %v1592, inf
      %v1603 = vsel %vm1602, %v1592, %v1601
      %vm1604 = vcmp.eq.f32.partialorder %v1592, 0.0
      %v1605 = vand.u32 %v1592, 2147483648
      %v1606 = vsel %vm1604, %v1605, %v1603
      %v1607 = vrsqrt.pop %v1593
      %v1608 = vmul.f32 %v1593, %v1607
      %vm1609 = vcmp.eq.f32.partialorder %v1593, inf
      %v1610 = vsel %vm1609, %v1593, %v1608
      %vm1611 = vcmp.eq.f32.partialorder %v1593, 0.0
      %v1612 = vand.u32 %v1593, 2147483648
      %v1613 = vsel %vm1611, %v1612, %v1610
      %v1614 = vrsqrt.pop %v1594
      %v1615 = vmul.f32 %v1594, %v1614
      %vm1616 = vcmp.eq.f32.partialorder %v1594, inf
      %v1617 = vsel %vm1616, %v1594, %v1615
      %vm1618 = vcmp.eq.f32.partialorder %v1594, 0.0
      %v1619 = vand.u32 %v1594, 2147483648
      %v1620 = vsel %vm1618, %v1619, %v1617
      %v1621 = vrsqrt.pop %v1595
      %v1622 = vmul.f32 %v1595, %v1621
      %vm1623 = vcmp.eq.f32.partialorder %v1595, inf
      %v1624 = vsel %vm1623, %v1595, %v1622
      %vm1625 = vcmp.eq.f32.partialorder %v1595, 0.0
      %v1626 = vand.u32 %v1595, 2147483648
      %v1627 = vsel %vm1625, %v1626, %v1624
      %v1628 = vrsqrt.pop %v1596
      %v1629 = vmul.f32 %v1596, %v1628
      %vm1630 = vcmp.eq.f32.partialorder %v1596, inf
      %v1631 = vsel %vm1630, %v1596, %v1629
      %vm1632 = vcmp.eq.f32.partialorder %v1596, 0.0
      %v1633 = vand.u32 %v1596, 2147483648
      %v1634 = vsel %vm1632, %v1633, %v1631
      %v1635 = vrsqrt.pop %v1597
      %v1636 = vmul.f32 %v1597, %v1635
      %vm1637 = vcmp.eq.f32.partialorder %v1597, inf
      %v1638 = vsel %vm1637, %v1597, %v1636
      %vm1639 = vcmp.eq.f32.partialorder %v1597, 0.0
      %v1640 = vand.u32 %v1597, 2147483648
      %v1641 = vsel %vm1639, %v1640, %v1638
      %v1642 = vrsqrt.pop %v1598
      %v1643 = vmul.f32 %v1598, %v1642
      %vm1644 = vcmp.eq.f32.partialorder %v1598, inf
      %v1645 = vsel %vm1644, %v1598, %v1643
      %vm1646 = vcmp.eq.f32.partialorder %v1598, 0.0
      %v1647 = vand.u32 %v1598, 2147483648
      %v1648 = vsel %vm1646, %v1647, %v1645
      %v1649 = vrsqrt.pop %v1599
      %v1650 = vmul.f32 %v1599, %v1649
      %vm1651 = vcmp.eq.f32.partialorder %v1599, inf
      %v1652 = vsel %vm1651, %v1599, %v1650
      %vm1653 = vcmp.eq.f32.partialorder %v1599, 0.0
      %v1654 = vand.u32 %v1599, 2147483648
      %v1655 = vsel %vm1653, %v1654, %v1652
      %v1656 = vmul.f32 %v1606, -1.0
      %v1657 = vmul.f32 %v1613, -1.0
      %v1658 = vmul.f32 %v1620, -1.0
      %v1659 = vmul.f32 %v1627, -1.0
      %v1660 = vmul.f32 %v1634, -1.0
      %v1661 = vmul.f32 %v1641, -1.0
      %v1662 = vmul.f32 %v1648, -1.0
      %v1663 = vmul.f32 %v1655, -1.0
      %vm1664 = vcmask 261120
      %v1665 = vsel %vm1664, %v1656, -inf
      %1666 = vmax.xlane.f32.xlu0 %v1665
      %v1667 = vpop.xlane.xlu0 %1666
      %v1668 = vsel %vm1664, %v1657, -inf
      %1669 = vmax.xlane.f32.xlu0 %v1668
      %v1670 = vpop.xlane.xlu0 %1669
      %v1671 = vsel %vm1664, %v1658, -inf
      %1672 = vmax.xlane.f32.xlu0 %v1671
      %v1673 = vpop.xlane.xlu0 %1672
      %v1674 = vsel %vm1664, %v1659, -inf
      %1675 = vmax.xlane.f32.xlu0 %v1674
      %v1676 = vpop.xlane.xlu0 %1675
      %v1677 = vsel %vm1664, %v1660, -inf
      %1678 = vmax.xlane.f32.xlu0 %v1677
      %v1679 = vpop.xlane.xlu0 %1678
      %v1680 = vsel %vm1664, %v1661, -inf
      %1681 = vmax.xlane.f32.xlu0 %v1680
      %v1682 = vpop.xlane.xlu0 %1681
      %v1683 = vsel %vm1664, %v1662, -inf
      %1684 = vmax.xlane.f32.xlu0 %v1683
      %v1685 = vpop.xlane.xlu0 %1684
      %v1686 = vsel %vm1664, %v1663, -inf
      %1687 = vmax.xlane.f32.xlu0 %v1686
      %v1688 = vpop.xlane.xlu0 %1687
      %v1689 = vsub.f32 %v1656, %v1667
      %v1690 = vsub.f32 %v1657, %v1670
      %v1691 = vsub.f32 %v1658, %v1673
      %v1692 = vsub.f32 %v1659, %v1676
      %v1693 = vsub.f32 %v1660, %v1679
      %v1694 = vsub.f32 %v1661, %v1682
      %v1695 = vsub.f32 %v1662, %v1685
      %v1696 = vsub.f32 %v1663, %v1688
      %v1697 = vmul.f32 %v1689, 1.442695
      %v1698 = vpow.pop %v1697
      %v1699 = vmul.f32 %v1690, 1.442695
      %v1700 = vpow.pop %v1699
      %v1701 = vmul.f32 %v1691, 1.442695
      %v1702 = vpow.pop %v1701
      %v1703 = vmul.f32 %v1692, 1.442695
      %v1704 = vpow.pop %v1703
      %v1705 = vmul.f32 %v1693, 1.442695
      %v1706 = vpow.pop %v1705
      %v1707 = vmul.f32 %v1694, 1.442695
      %v1708 = vpow.pop %v1707
      %v1709 = vmul.f32 %v1695, 1.442695
      %v1710 = vpow.pop %v1709
      %v1711 = vmul.f32 %v1696, 1.442695
      %v1712 = vpow.pop %v1711
      %v1713 = vmul.f32 %v1698, %v978
      %v1714 = vmul.f32 %v1700, %v981
      %v1715 = vmul.f32 %v1702, %v986
      %v1716 = vmul.f32 %v1704, %v989
      %v1717 = vmul.f32 %v1706, %v994
      %v1718 = vmul.f32 %v1708, %v997
      %v1719 = vmul.f32 %v1710, %v1002
      %v1720 = vmul.f32 %v1712, %v1005
      %v1721 = vsel %vm1664, %v1713, 0.0
      %1722 = vadd.xlane.f32.xlu0 %v1721
      %v1723 = vpop.xlane.xlu0 %1722
      %v1724 = vsel %vm1664, %v1714, 0.0
      %1725 = vadd.xlane.f32.xlu0 %v1724
      %v1726 = vpop.xlane.xlu0 %1725
      %v1727 = vsel %vm1664, %v1715, 0.0
      %1728 = vadd.xlane.f32.xlu0 %v1727
      %v1729 = vpop.xlane.xlu0 %1728
      %v1730 = vsel %vm1664, %v1716, 0.0
      %1731 = vadd.xlane.f32.xlu0 %v1730
      %v1732 = vpop.xlane.xlu0 %1731
      %v1733 = vsel %vm1664, %v1717, 0.0
      %1734 = vadd.xlane.f32.xlu0 %v1733
      %v1735 = vpop.xlane.xlu0 %1734
      %v1736 = vsel %vm1664, %v1718, 0.0
      %1737 = vadd.xlane.f32.xlu0 %v1736
      %v1738 = vpop.xlane.xlu0 %1737
      %v1739 = vsel %vm1664, %v1719, 0.0
      %1740 = vadd.xlane.f32.xlu0 %v1739
      %v1741 = vpop.xlane.xlu0 %1740
      %v1742 = vsel %vm1664, %v1720, 0.0
      %1743 = vadd.xlane.f32.xlu0 %v1742
      %v1744 = vpop.xlane.xlu0 %1743
      %v1745 = vsel %vm1664, %v1698, 0.0
      %1746 = vadd.xlane.f32.xlu0 %v1745
      %v1747 = vpop.xlane.xlu0 %1746
      %v1748 = vsel %vm1664, %v1700, 0.0
      %1749 = vadd.xlane.f32.xlu0 %v1748
      %v1750 = vpop.xlane.xlu0 %1749
      %v1751 = vsel %vm1664, %v1702, 0.0
      %1752 = vadd.xlane.f32.xlu0 %v1751
      %v1753 = vpop.xlane.xlu0 %1752
      %v1754 = vsel %vm1664, %v1704, 0.0
      %1755 = vadd.xlane.f32.xlu0 %v1754
      %v1756 = vpop.xlane.xlu0 %1755
      %v1757 = vsel %vm1664, %v1706, 0.0
      %1758 = vadd.xlane.f32.xlu0 %v1757
      %v1759 = vpop.xlane.xlu0 %1758
      %v1760 = vsel %vm1664, %v1708, 0.0
      %1761 = vadd.xlane.f32.xlu0 %v1760
      %v1762 = vpop.xlane.xlu0 %1761
      %v1763 = vsel %vm1664, %v1710, 0.0
      %1764 = vadd.xlane.f32.xlu0 %v1763
      %v1765 = vpop.xlane.xlu0 %1764
      %v1766 = vsel %vm1664, %v1712, 0.0
      %1767 = vadd.xlane.f32.xlu0 %v1766
      %v1768 = vpop.xlane.xlu0 %1767
      %v1769 = vrcp.pop %v1747
      %v1770 = vrcp.pop %v1750
      %v1771 = vrcp.pop %v1753
      %v1772 = vrcp.pop %v1756
      %v1773 = vrcp.pop %v1759
      %v1774 = vrcp.pop %v1762
      %v1775 = vrcp.pop %v1765
      %v1776 = vrcp.pop %v1768
      %v1777 = vmul.f32 %v1723, %v1769
      %v1778 = vmul.f32 %v1726, %v1770
      %v1779 = vmul.f32 %v1729, %v1771
      %v1780 = vmul.f32 %v1732, %v1772
      %v1781 = vmul.f32 %v1735, %v1773
      %v1782 = vmul.f32 %v1738, %v1774
      %v1783 = vmul.f32 %v1741, %v1775
      %v1784 = vmul.f32 %v1744, %v1776
      %vm1785 = vcmask 7168
      %1786 = vst.msk [vmem:[%s491] sm:$0xff] %vm1785, %v1777
      %1787 = vst.msk [vmem:[%s491 + $0x8] sm:$0xff] %vm1785, %v1778
      %1788 = vst.msk [vmem:[%s491 + $0x10] sm:$0xff] %vm1785, %v1779
      %1789 = vst.msk [vmem:[%s491 + $0x18] sm:$0xff] %vm1785, %v1780
      %1790 = vst.msk [vmem:[%s491 + $0x20] sm:$0xff] %vm1785, %v1781
      %1791 = vst.msk [vmem:[%s491 + $0x28] sm:$0xff] %vm1785, %v1782
      %1792 = vst.msk [vmem:[%s491 + $0x30] sm:$0xff] %vm1785, %v1783
      %1793 = vst.msk [vmem:[%s491 + $0x38] sm:$0xff] %vm1785, %v1784
      %s1794 = smul.u32 8, %s25
      %p1795 = scmp.lt.s32.totalorder %s1794, 15
      %s1796 = scalar_select %p1795, %s1794, 15
      %s1797 = smul.addr %s1796, 8
      %s1798 = scalar_lea.vmem %s14, %s1797
      // Predicated region
      $region77: #{rbfdqn_forward.1} parent=75 // pred_check
        %p1799 = pneg %p347
      $region78: #{rbfdqn_forward.1} parent=75 // pred_check_branch
        %1801 = sbr.rel (%p1799) target = $region80
      $region79: #{rbfdqn_forward.1} parent=75 // pred_region
        %s1802 = smul.u32 8, %s25
      $region80: #{rbfdqn_forward.1} parent=75 // pred_fallthru
        _
    $region76: #{rbfdqn_forward.1} parent=5 // pred_fallthru
      _
    %p1803 = scmp.le.s32.totalorder 2, %s20
    // Predicated region
    $region81: #{rbfdqn_forward.1} parent=5 // pred_check
      %p1804 = pneg %p1803
    $region82: #{rbfdqn_forward.1} parent=5 // pred_check_branch
      %1806 = sbr.rel (%p1804) target = $region84
    $region83: #{rbfdqn_forward.1} parent=5 // pred_region
      %s1807 = ssub.s32 %s20, 2
      // Predicated region
      $region85: #{rbfdqn_forward.1} parent=83 // pred_check
        %p1808 = pneg %p353
      $region86: #{rbfdqn_forward.1} parent=83 // pred_check_branch
        %1810 = sbr.rel (%p1808) target = $region88
      $region87: #{rbfdqn_forward.1} parent=83 // pred_region
        %s1811 = smul.u32 8, %s26
        %p1812 = scmp.lt.s32.totalorder %s1811, 15
        %s1813 = scalar_select %p1812, %s1811, 15
        %s1814 = smul.addr %s1813, 8
        %s1815 = scalar_lea.vmem %s14, %s1814
      $region88: #{rbfdqn_forward.1} parent=83 // pred_fallthru
        _
    $region84: #{rbfdqn_forward.1} parent=5 // pred_fallthru
      _
  $region6: #{rbfdqn_forward.1} parent=0 // loop_footer
    %s24 = sadd.s32 1, %s20
  $region7: #{rbfdqn_forward.1} parent=0 // loop_footer_branch
    %19 = sbr.rel target = $region3
  $region8: #{rbfdqn_forward.1} parent=0 // loop_exit
    _

</llo_original>
